<compile_context>
chip_gen: v5e
topology: v5e:2x2
jax: 0.10.0
libtpu: 0.0.40
codegen_flags: <defaults>
</compile_context>

<pallas_src>
import math
from functools import partial

import jax
import jax.numpy as jnp
from jax import lax
from jax.experimental import pallas as pl
from jax.experimental.pallas import tpu as pltpu


def _layernorm(x, gamma, beta, eps=1e-6):
    # x: (N, D); gamma/beta: (1, D). Biased variance, eps=1e-6 like nn.LayerNorm.
    mu = jnp.mean(x, axis=-1, keepdims=True)
    var = jnp.mean((x - mu) ** 2, axis=-1, keepdims=True)
    return (x - mu) * lax.rsqrt(var + eps) * gamma + beta


def _gelu_exact(x):
    # nn.GELU() default = exact erf-based GELU (kept in f32).
    return 0.5 * x * (1.0 + lax.erf(x * (1.0 / math.sqrt(2.0))))


def block_kernel(x_ref,
                 ln1g_ref, ln1b_ref,
                 wqkv_ref, bqkv_ref,
                 wproj_ref, bproj_ref,
                 ln2g_ref, ln2b_ref,
                 w1_ref, b1_ref,
                 w2_ref, b2_ref,
                 o_ref,
                 *, bt, seq, seq_valid, dim, n_heads):
    H = n_heads
    hd = dim // H
    N = bt * seq                     # rows in this block: bt samples x seq tokens

    x = x_ref[...]                   # (N, D) f32

    # ---- LayerNorm 1 (f32) ----
    xn = _layernorm(x, ln1g_ref[...], ln1b_ref[...])

    # ---- QKV projection: bf16 operands, f32 accumulation.  1/sqrt(hd) is
    # already folded into the q columns of wqkv/bqkv by the wrapper. ----
    qkv = jnp.dot(xn.astype(jnp.bfloat16), wqkv_ref[...],
                  preferred_element_type=jnp.float32) + bqkv_ref[...]   # (N, 3D) f32

    # qkv column layout = [q(D) | k(D) | v(D)], each head-major (matches the
    # PyTorch reshape(n, t, 3, H, hd)).  Pack to a (H*bt, seq, hd) head-major
    # batch with leading-axis concat + leading-dim reshape (no transposes).
    def to_heads(offset):            # -> (H*bt, seq, hd), bf16 for the MXU
        parts = [qkv[:, offset + h * hd: offset + (h + 1) * hd] for h in range(H)]
        return jnp.concatenate(parts, axis=0).reshape(H * bt, seq, hd).astype(jnp.bfloat16)

    q3 = to_heads(0)
    k3 = to_heads(dim)
    v3 = to_heads(2 * dim)

    # ---- Attention: all heads & samples in one batched einsum pair.
    # (Contraction is only hd wide; attention is <5% of ViT FLOPs, so we don't
    # try to widen it -- the MLP/qkv/proj matmuls are the binding work.) ----
    s = jnp.einsum('bqd,bkd->bqk', q3, k3,
                   preferred_element_type=jnp.float32)          # (H*bt, seq, seq) f32
    if seq > seq_valid:
        # Padded key tokens must not contribute to the softmax.
        col = lax.broadcasted_iota(jnp.int32, s.shape, 2)
        s = jnp.where(col < seq_valid, s, -1e30)
    s = s - jnp.max(s, axis=-1, keepdims=True)
    p = jnp.exp(s)
    p = p * pl.reciprocal(jnp.sum(p, axis=-1, keepdims=True), approx=True)
    o3 = jnp.einsum('bqk,bkd->bqd', p.astype(jnp.bfloat16), v3,
                    preferred_element_type=jnp.float32)          # (H*bt, seq, hd) f32
    o3 = o3.astype(jnp.bfloat16)

    # ---- Head merge folded into the projection: attn = sum_h o_h @ Wproj[h]
    # (row blocks of wproj).  No lane concat / relayout; same MXU FLOPs. ----
    attn = jnp.zeros((N, dim), jnp.float32)
    for h in range(H):
        oh = o3[h * bt:(h + 1) * bt].reshape(N, hd)              # leading-dim slice
        attn = attn + jnp.dot(oh, wproj_ref[h * hd:(h + 1) * hd, :],
                              preferred_element_type=jnp.float32)
    attn = attn + bproj_ref[...]
    x1 = x + attn                    # residual 1 (f32)

    # ---- LayerNorm 2 + MLP (bf16 matmul operands, f32 accumulate/activations) ----
    xn2 = _layernorm(x1, ln2g_ref[...], ln2b_ref[...])
    h1 = jnp.dot(xn2.astype(jnp.bfloat16), w1_ref[...],
                 preferred_element_type=jnp.float32) + b1_ref[...]
    h1 = _gelu_exact(h1)
    h2 = jnp.dot(h1.astype(jnp.bfloat16), w2_ref[...],
                 preferred_element_type=jnp.float32) + b2_ref[...]

    o_ref[...] = x1 + h2             # residual 2


def _pick_batch_block(B, T, target_rows=256):
    """Pick bt | B with bt*T a sublane multiple and bt*T <= target rows, preferring
    a grid of >= 2 steps so v7x's two TensorCores both get work.  Falls back to
    bt=B (whole-array rows, always BlockSpec-legal)."""
    legal = [d for d in range(1, B + 1)
             if B % d == 0 and (d * T) % 8 == 0 and d * T <= max(target_rows, T)]
    if not legal:
        return B
    multi = [d for d in legal if B // d >= 2]
    return max(multi) if multi else max(legal)


def vit_block(x, params, *, dim, n_heads, batch_block=None, vmem_limit_bytes=None):
    B, T, D = x.shape
    assert D == dim and dim % n_heads == 0

    (ln1g, ln1b, wqkv, bqkv, wproj, bproj,
     ln2g, ln2b, w1, b1, w2, b2) = params
    hidden = w1.shape[1]
    hd = dim // n_heads

    # Fold the attention scale into the q columns of the qkv projection (one-time,
    # host/XLA side -- removes a VPU multiply per grid step in the kernel).
    qscale = hd ** (-0.5)
    wqkv = wqkv.at[:, :dim].multiply(qscale)
    bqkv = bqkv.at[:, :dim].multiply(qscale)

    # bf16 matmul weights (f32 accumulation in-kernel); biases/LN params stay f32.
    wqkv_b = wqkv.astype(jnp.bfloat16)
    wproj_b = wproj.astype(jnp.bfloat16)
    w1_b = w1.astype(jnp.bfloat16)
    w2_b = w2.astype(jnp.bfloat16)

    # Pad the token axis to a sublane multiple so (bt*T_pad, D) blocks are legal
    # even for ViT's T = 197; padded key columns are masked inside the kernel.
    T_pad = ((T + 7) // 8) * 8
    if T_pad != T:
        x = jnp.pad(x, ((0, 0), (0, T_pad - T), (0, 0)))

    # Per-generation VMEM capacity (per TensorCore).
    try:
        vmem_cap = int(pltpu.get_tpu_info().vmem_capacity_bytes)
    except Exception:
        vmem_cap = 64 << 20
    target_rows = 512 if vmem_cap >= (96 << 20) else 256   # v5e/v6e vs v7x

    bt = batch_block if batch_block is not None else _pick_batch_block(B, T_pad, target_rows)
    assert B % bt == 0 and (bt * T_pad) % 8 == 0
    rows = bt * T_pad
    n_total = B * T_pad

    # Lane-dense 2-D activations: (B*T_pad, D) in the wrapper, (bt*T_pad, D) blocks.
    x2 = x.reshape(n_total, D)

    if vmem_limit_bytes is None:
        # Weights single-buffered (bf16) + f32 biases / LN params.
        w_bytes = 2 * (D * 3 * D + D * D + D * hidden + hidden * D) \
                  + 4 * (3 * D + D + hidden + D + 4 * D)
        # f32 activation slabs (x, xn, qkv, x1, xn2, h1 pre+post GELU, h2, attn)
        # + bf16 casts fed to the MXU + per-head score/prob tensors.
        a_bytes = 4 * rows * (4 * D + 2 * 3 * D + 2 * hidden) \
                  + 2 * rows * (D + 3 * D + hidden) \
                  + (4 + 4 + 2) * n_heads * bt * T_pad * T_pad
        io_bytes = 2 * 2 * 4 * rows * D                     # double-buffered x / out
        est = w_bytes + a_bytes + io_bytes + (4 << 20)
        vmem_limit_bytes = max(32 << 20, min(int(est), vmem_cap - (8 << 20)))

    kernel = partial(block_kernel, bt=bt, seq=T_pad, seq_valid=T,
                     dim=dim, n_heads=n_heads)

    x_spec = pl.BlockSpec((rows, D), lambda i: (i, 0))
    out_spec = pl.BlockSpec((rows, D), lambda i: (i, 0))

    def make_call(weight_buffers):
        def wspec(shape):
            kwargs = {}
            if weight_buffers is not None:
                kwargs["pipeline_mode"] = pl.Buffered(weight_buffers)
            return pl.BlockSpec(shape, lambda i: (0,) * len(shape), **kwargs)
        return pl.pallas_call(
            kernel,
            out_shape=jax.ShapeDtypeStruct((n_total, D), jnp.float32),
            grid_spec=pltpu.PrefetchScalarGridSpec(
                num_scalar_prefetch=0,
                grid=(B // bt,),
                in_specs=[
                    x_spec,
                    wspec((1, D)), wspec((1, D)),            # ln1 gamma/beta
                    wspec((D, 3 * D)), wspec((1, 3 * D)),    # qkv W (bf16), b
                    wspec((D, D)), wspec((1, D)),            # proj W (bf16), b
                    wspec((1, D)), wspec((1, D)),            # ln2 gamma/beta
                    wspec((D, hidden)), wspec((1, hidden)),  # fc1 W (bf16), b
                    wspec((hidden, D)), wspec((1, D)),       # fc2 W (bf16), b
                ],
                out_specs=out_spec,
            ),
            compiler_params=pltpu.CompilerParams(
                dimension_semantics=("parallel",),
                vmem_limit_bytes=int(vmem_limit_bytes)),
        )

    args = (x2, ln1g, ln1b, wqkv_b, bqkv, wproj_b, bproj,
            ln2g, ln2b, w1_b, b1, w2_b, b2)
    try:
        # Grid-invariant weights: single buffer (halves weight VMEM residency;
        # required headroom on v7x's 64 MiB VMEM).
        out2 = make_call(1)(*args)
    except Exception:
        # TODO(synk): drop this fallback once pipeline_mode=pl.Buffered(1) on the
        # outer pallas_call pipeline is confirmed on all deployed jax versions.
        out2 = make_call(None)(*args)

    out = out2.reshape(B, T_pad, D)
    if T_pad != T:
        out = out[:, :T, :]
    return out


def init_params(key, dim, n_heads, mlp_ratio=4.0):
    hidden = int(dim * mlp_ratio)
    ks = jax.random.split(key, 8)
    scale = 0.02

    # Linear weights created PyTorch-style (out, in), then transposed to (in, out).
    wqkv_t = jax.random.normal(ks[0], (3 * dim, dim), jnp.float32) * scale
    bqkv = jax.random.normal(ks[1], (3 * dim,), jnp.float32) * scale   # qkv_bias=True
    wproj_t = jax.random.normal(ks[2], (dim, dim), jnp.float32) * scale
    bproj = jax.random.normal(ks[3], (dim,), jnp.float32) * scale
    w1_t = jax.random.normal(ks[4], (hidden, dim), jnp.float32) * scale
    b1 = jax.random.normal(ks[5], (hidden,), jnp.float32) * scale
    w2_t = jax.random.normal(ks[6], (dim, hidden), jnp.float32) * scale
    b2 = jax.random.normal(ks[7], (dim,), jnp.float32) * scale

    ln1g = jnp.ones((dim,), jnp.float32)
    ln1b = jnp.zeros((dim,), jnp.float32)
    ln2g = jnp.ones((dim,), jnp.float32)
    ln2b = jnp.zeros((dim,), jnp.float32)

    r1 = lambda v: v.reshape(1, -1)
    return (r1(ln1g), r1(ln1b),
            wqkv_t.T, r1(bqkv),
            wproj_t.T, r1(bproj),
            r1(ln2g), r1(ln2b),
            w1_t.T, r1(b1),
            w2_t.T, r1(b2))


def block_ref(x, params, *, dim, n_heads):
    # pure-JAX (f32) reference for sanity check
    (ln1g, ln1b, wqkv, bqkv, wproj, bproj,
     ln2g, ln2b, w1, b1, w2, b2) = params
    B, T, D = x.shape
    hd = dim // n_heads

    def ln(v, g, b):
        mu = v.mean(-1, keepdims=True)
        var = ((v - mu) ** 2).mean(-1, keepdims=True)
        return (v - mu) / jnp.sqrt(var + 1e-6) * g + b

    xn = ln(x, ln1g, ln1b)
    qkv = xn @ wqkv + bqkv                                    # (B,T,3D)
    qkv = qkv.reshape(B, T, 3, n_heads, hd).transpose(2, 0, 3, 1, 4)
    q, k, v = qkv[0], qkv[1], qkv[2]                          # (B,H,T,hd)
    s = (q @ k.transpose(0, 1, 3, 2)) * (hd ** -0.5)
    p = jax.nn.softmax(s, axis=-1)
    w = (p @ v).transpose(0, 2, 1, 3).reshape(B, T, D)
    x1 = x + (w @ wproj + bproj)
    xn2 = ln(x1, ln2g, ln2b)
    h1 = jax.nn.gelu(xn2 @ w1 + b1, approximate=False)
    return x1 + (h1 @ w2 + b2)


if __name__ == "__main__":
    key = jax.random.PRNGKey(0)
    kx, kp, kx2 = jax.random.split(key, 3)

    B, T, DIM, N_HEADS = 2, 8, 32, 4   # tokens = n_patches+1 = 8
    params = init_params(kp, DIM, N_HEADS, mlp_ratio=4.0)

    x = jax.random.normal(kx, (B, T, DIM), jnp.float32)
    out = jax.block_until_ready(vit_block(x, params, dim=DIM, n_heads=N_HEADS))
    ref = block_ref(x, params, dim=DIM, n_heads=N_HEADS)
    assert out.shape == (B, T, DIM)
    # Tolerance accounts for bf16 matmul operands + approx softmax reciprocal.
    err = float(jnp.max(jnp.abs(out - ref)))
    assert jnp.allclose(out, ref, atol=1e-2, rtol=1e-2), f"max err {err}"

    # Sequence length not divisible by 8: exercises the pad + key-mask path
    # (ViT's real T = n_patches + 1 = 197 also hits this).
    T2 = 10
    x_b = jax.random.normal(kx2, (B, T2, DIM), jnp.float32)
    out_b = jax.block_until_ready(vit_block(x_b, params, dim=DIM, n_heads=N_HEADS))
    ref_b = block_ref(x_b, params, dim=DIM, n_heads=N_HEADS)
    assert out_b.shape == (B, T2, DIM)
    err_b = float(jnp.max(jnp.abs(out_b - ref_b)))
    assert jnp.allclose(out_b, ref_b, atol=1e-2, rtol=1e-2), f"max err {err_b}"

    print("KERNEL_OK")
</pallas_src>

<mosaic_0001>
module attributes {stable_mosaic.version = 11 : i64} {
  func.func @block_kernel(%arg0: i32, %arg1: memref<8x32xf32, #tpu.memory_space<vmem>>, %arg2: memref<1x32xf32, #tpu.memory_space<vmem>>, %arg3: memref<1x32xf32, #tpu.memory_space<vmem>>, %arg4: memref<32x96xbf16, #tpu.memory_space<vmem>>, %arg5: memref<1x96xf32, #tpu.memory_space<vmem>>, %arg6: memref<32x32xbf16, #tpu.memory_space<vmem>>, %arg7: memref<1x32xf32, #tpu.memory_space<vmem>>, %arg8: memref<1x32xf32, #tpu.memory_space<vmem>>, %arg9: memref<1x32xf32, #tpu.memory_space<vmem>>, %arg10: memref<32x128xbf16, #tpu.memory_space<vmem>>, %arg11: memref<1x128xf32, #tpu.memory_space<vmem>>, %arg12: memref<128x32xbf16, #tpu.memory_space<vmem>>, %arg13: memref<1x32xf32, #tpu.memory_space<vmem>>, %arg14: memref<8x32xf32, #tpu.memory_space<vmem>>) attributes {dimension_semantics = [#tpu.dimension_semantics<parallel>], iteration_bounds = array<i64: 2>, scalar_prefetch = 0 : i64, scratch_operands = 0 : i64, tpu.core_type = #tpu.core_type<tc>, window_params = [{transform_indices = @transform_0, window_bounds = array<i64: 8, 32>}, {pipeline_mode = #tpu.pipeline_mode<synchronous>, transform_indices = @transform_1, window_bounds = array<i64: 1, 32>}, {pipeline_mode = #tpu.pipeline_mode<synchronous>, transform_indices = @transform_2, window_bounds = array<i64: 1, 32>}, {pipeline_mode = #tpu.pipeline_mode<synchronous>, transform_indices = @transform_3, window_bounds = array<i64: 32, 96>}, {pipeline_mode = #tpu.pipeline_mode<synchronous>, transform_indices = @transform_4, window_bounds = array<i64: 1, 96>}, {pipeline_mode = #tpu.pipeline_mode<synchronous>, transform_indices = @transform_5, window_bounds = array<i64: 32, 32>}, {pipeline_mode = #tpu.pipeline_mode<synchronous>, transform_indices = @transform_6, window_bounds = array<i64: 1, 32>}, {pipeline_mode = #tpu.pipeline_mode<synchronous>, transform_indices = @transform_7, window_bounds = array<i64: 1, 32>}, {pipeline_mode = #tpu.pipeline_mode<synchronous>, transform_indices = @transform_8, window_bounds = array<i64: 1, 32>}, {pipeline_mode = #tpu.pipeline_mode<synchronous>, transform_indices = @transform_9, window_bounds = array<i64: 32, 128>}, {pipeline_mode = #tpu.pipeline_mode<synchronous>, transform_indices = @transform_10, window_bounds = array<i64: 1, 128>}, {pipeline_mode = #tpu.pipeline_mode<synchronous>, transform_indices = @transform_11, window_bounds = array<i64: 128, 32>}, {pipeline_mode = #tpu.pipeline_mode<synchronous>, transform_indices = @transform_12, window_bounds = array<i64: 1, 32>}, {transform_indices = @transform_13, window_bounds = array<i64: 8, 32>}]} {
    %c0 = arith.constant 0 : index
    %c0_0 = arith.constant 0 : index
    %0 = vector.load %arg1[%c0, %c0_0] : memref<8x32xf32, #tpu.memory_space<vmem>>, vector<8x32xf32>
    %c0_1 = arith.constant 0 : index
    %c0_2 = arith.constant 0 : index
    %1 = vector.load %arg2[%c0_1, %c0_2] : memref<1x32xf32, #tpu.memory_space<vmem>>, vector<1x32xf32>
    %c0_3 = arith.constant 0 : index
    %c0_4 = arith.constant 0 : index
    %2 = vector.load %arg3[%c0_3, %c0_4] : memref<1x32xf32, #tpu.memory_space<vmem>>, vector<1x32xf32>
    %cst = arith.constant dense<0.000000e+00> : vector<8xf32>
    %3 = vector.multi_reduction <add>, %0, %cst [1] : vector<8x32xf32> to vector<8xf32>
    %4 = vector.shape_cast %3 : vector<8xf32> to vector<8x1xf32>
    %cst_5 = arith.constant 3.200000e+01 : f32
    %5 = vector.broadcast %cst_5 : f32 to vector<8x1xf32>
    %6 = arith.divf %4, %5 : vector<8x1xf32>
    %7 = vector.broadcast %6 : vector<8x1xf32> to vector<8x32xf32>
    %8 = arith.subf %0, %7 : vector<8x32xf32>
    %9 = arith.mulf %8, %8 : vector<8x32xf32>
    %cst_6 = arith.constant dense<0.000000e+00> : vector<8xf32>
    %10 = vector.multi_reduction <add>, %9, %cst_6 [1] : vector<8x32xf32> to vector<8xf32>
    %11 = vector.shape_cast %10 : vector<8xf32> to vector<8x1xf32>
    %cst_7 = arith.constant 3.200000e+01 : f32
    %12 = vector.broadcast %cst_7 : f32 to vector<8x1xf32>
    %13 = arith.divf %11, %12 : vector<8x1xf32>
    %14 = vector.broadcast %6 : vector<8x1xf32> to vector<8x32xf32>
    %15 = arith.subf %0, %14 : vector<8x32xf32>
    %cst_8 = arith.constant 9.99999997E-7 : f32
    %16 = vector.broadcast %cst_8 : f32 to vector<8x1xf32>
    %17 = arith.addf %13, %16 : vector<8x1xf32>
    %18 = math.rsqrt %17 : vector<8x1xf32>
    %19 = vector.broadcast %18 : vector<8x1xf32> to vector<8x32xf32>
    %20 = arith.mulf %15, %19 : vector<8x32xf32>
    %21 = vector.broadcast %1 : vector<1x32xf32> to vector<8x32xf32>
    %22 = arith.mulf %20, %21 : vector<8x32xf32>
    %23 = vector.broadcast %2 : vector<1x32xf32> to vector<8x32xf32>
    %24 = arith.addf %22, %23 : vector<8x32xf32>
    %25 = arith.truncf %24 : vector<8x32xf32> to vector<8x32xbf16>
    %c0_9 = arith.constant 0 : index
    %c0_10 = arith.constant 0 : index
    %26 = vector.load %arg4[%c0_9, %c0_10] : memref<32x96xbf16, #tpu.memory_space<vmem>>, vector<32x96xbf16>
    %cst_11 = arith.constant dense<0.000000e+00> : vector<8x96xf32>
    %27 = tpu.matmul %25, %26, %cst_11 {dimension_numbers = #tpu.dot_dimension_numbers<[1], [0], [0], [1], [0, 0, 1, 1], [], []>} : vector<8x32xbf16>, vector<32x96xbf16>, vector<8x96xf32> -> vector<8x96xf32>
    %c0_12 = arith.constant 0 : index
    %c0_13 = arith.constant 0 : index
    %28 = vector.load %arg5[%c0_12, %c0_13] : memref<1x96xf32, #tpu.memory_space<vmem>>, vector<1x96xf32>
    %29 = vector.broadcast %28 : vector<1x96xf32> to vector<8x96xf32>
    %30 = arith.addf %27, %29 : vector<8x96xf32>
    %31 = vector.extract_strided_slice %30 {offsets = [0, 0], sizes = [8, 8], strides = [1, 1]} : vector<8x96xf32> to vector<8x8xf32>
    %32 = vector.extract_strided_slice %30 {offsets = [0, 8], sizes = [8, 8], strides = [1, 1]} : vector<8x96xf32> to vector<8x8xf32>
    %33 = vector.extract_strided_slice %30 {offsets = [0, 16], sizes = [8, 8], strides = [1, 1]} : vector<8x96xf32> to vector<8x8xf32>
    %34 = vector.extract_strided_slice %30 {offsets = [0, 24], sizes = [8, 8], strides = [1, 1]} : vector<8x96xf32> to vector<8x8xf32>
    %35 = tpu.concatenate %31, %32, %33, %34 in 0 : vector<8x8xf32>, vector<8x8xf32>, vector<8x8xf32>, vector<8x8xf32> -> vector<32x8xf32>
    %36 = vector.shape_cast %35 : vector<32x8xf32> to vector<4x8x8xf32>
    %37 = arith.truncf %36 : vector<4x8x8xf32> to vector<4x8x8xbf16>
    %38 = vector.extract_strided_slice %30 {offsets = [0, 32], sizes = [8, 8], strides = [1, 1]} : vector<8x96xf32> to vector<8x8xf32>
    %39 = vector.extract_strided_slice %30 {offsets = [0, 40], sizes = [8, 8], strides = [1, 1]} : vector<8x96xf32> to vector<8x8xf32>
    %40 = vector.extract_strided_slice %30 {offsets = [0, 48], sizes = [8, 8], strides = [1, 1]} : vector<8x96xf32> to vector<8x8xf32>
    %41 = vector.extract_strided_slice %30 {offsets = [0, 56], sizes = [8, 8], strides = [1, 1]} : vector<8x96xf32> to vector<8x8xf32>
    %42 = tpu.concatenate %38, %39, %40, %41 in 0 : vector<8x8xf32>, vector<8x8xf32>, vector<8x8xf32>, vector<8x8xf32> -> vector<32x8xf32>
    %43 = vector.shape_cast %42 : vector<32x8xf32> to vector<4x8x8xf32>
    %44 = arith.truncf %43 : vector<4x8x8xf32> to vector<4x8x8xbf16>
    %45 = vector.extract_strided_slice %30 {offsets = [0, 64], sizes = [8, 8], strides = [1, 1]} : vector<8x96xf32> to vector<8x8xf32>
    %46 = vector.extract_strided_slice %30 {offsets = [0, 72], sizes = [8, 8], strides = [1, 1]} : vector<8x96xf32> to vector<8x8xf32>
    %47 = vector.extract_strided_slice %30 {offsets = [0, 80], sizes = [8, 8], strides = [1, 1]} : vector<8x96xf32> to vector<8x8xf32>
    %48 = vector.extract_strided_slice %30 {offsets = [0, 88], sizes = [8, 8], strides = [1, 1]} : vector<8x96xf32> to vector<8x8xf32>
    %49 = tpu.concatenate %45, %46, %47, %48 in 0 : vector<8x8xf32>, vector<8x8xf32>, vector<8x8xf32>, vector<8x8xf32> -> vector<32x8xf32>
    %50 = vector.shape_cast %49 : vector<32x8xf32> to vector<4x8x8xf32>
    %51 = arith.truncf %50 : vector<4x8x8xf32> to vector<4x8x8xbf16>
    "tpu.trace_start"() <{level = 10 : i32, message = "bqd,bkd->bqk"}> : () -> ()
    %cst_14 = arith.constant dense<0.000000e+00> : vector<4x8x8xf32>
    %52 = tpu.matmul %37, %44, %cst_14 {dimension_numbers = #tpu.dot_dimension_numbers<[2], [2], [1], [1], [0, 0, 0, 1, 1, 1], [0], [0]>} : vector<4x8x8xbf16>, vector<4x8x8xbf16>, vector<4x8x8xf32> -> vector<4x8x8xf32>
    "tpu.trace_stop"() : () -> ()
    %cst_15 = arith.constant dense<0xFF800000> : vector<4x8xf32>
    %53 = vector.multi_reduction <maximumf>, %52, %cst_15 [2] : vector<4x8x8xf32> to vector<4x8xf32>
    %54 = vector.shape_cast %53 : vector<4x8xf32> to vector<4x8x1xf32>
    %55 = vector.broadcast %54 : vector<4x8x1xf32> to vector<4x8x8xf32>
    %56 = arith.subf %52, %55 : vector<4x8x8xf32>
    %57 = math.exp %56 : vector<4x8x8xf32>
    %cst_16 = arith.constant dense<0.000000e+00> : vector<4x8xf32>
    %58 = vector.multi_reduction <add>, %57, %cst_16 [2] : vector<4x8x8xf32> to vector<4x8xf32>
    %59 = vector.shape_cast %58 : vector<4x8xf32> to vector<4x8x1xf32>
    %60 = tpu.reciprocal %59 {approx = true} : vector<4x8x1xf32> -> vector<4x8x1xf32>
    %61 = vector.broadcast %60 : vector<4x8x1xf32> to vector<4x8x8xf32>
    %62 = arith.mulf %57, %61 : vector<4x8x8xf32>
    %63 = arith.truncf %62 : vector<4x8x8xf32> to vector<4x8x8xbf16>
    "tpu.trace_start"() <{level = 10 : i32, message = "bqk,bkd->bqd"}> : () -> ()
    %cst_17 = arith.constant dense<0.000000e+00> : vector<4x8x8xf32>
    %64 = tpu.matmul %63, %51, %cst_17 {dimension_numbers = #tpu.dot_dimension_numbers<[2], [1], [1], [2], [0, 0, 0, 1, 1, 2], [0], [0]>} : vector<4x8x8xbf16>, vector<4x8x8xbf16>, vector<4x8x8xf32> -> vector<4x8x8xf32>
    "tpu.trace_stop"() : () -> ()
    %65 = arith.truncf %64 : vector<4x8x8xf32> to vector<4x8x8xbf16>
    %cst_18 = arith.constant 0.000000e+00 : f32
    %66 = vector.broadcast %cst_18 : f32 to vector<8x32xf32>
    %67 = vector.extract_strided_slice %65 {offsets = [0, 0, 0], sizes = [1, 8, 8], strides = [1, 1, 1]} : vector<4x8x8xbf16> to vector<1x8x8xbf16>
    %68 = vector.shape_cast %67 : vector<1x8x8xbf16> to vector<8x8xbf16>
    %c0_19 = arith.constant 0 : index
    %c0_20 = arith.constant 0 : index
    %69 = vector.load %arg6[%c0_19, %c0_20] : memref<32x32xbf16, #tpu.memory_space<vmem>>, vector<8x32xbf16>
    %cst_21 = arith.constant dense<0.000000e+00> : vector<8x32xf32>
    %70 = tpu.matmul %68, %69, %cst_21 {dimension_numbers = #tpu.dot_dimension_numbers<[1], [0], [0], [1], [0, 0, 1, 1], [], []>} : vector<8x8xbf16>, vector<8x32xbf16>, vector<8x32xf32> -> vector<8x32xf32>
    %71 = arith.addf %66, %70 : vector<8x32xf32>
    %72 = vector.extract_strided_slice %65 {offsets = [1, 0, 0], sizes = [1, 8, 8], strides = [1, 1, 1]} : vector<4x8x8xbf16> to vector<1x8x8xbf16>
    %73 = vector.shape_cast %72 : vector<1x8x8xbf16> to vector<8x8xbf16>
    %c8 = arith.constant 8 : index
    %c0_22 = arith.constant 0 : index
    %74 = vector.load %arg6[%c8, %c0_22] : memref<32x32xbf16, #tpu.memory_space<vmem>>, vector<8x32xbf16>
    %cst_23 = arith.constant dense<0.000000e+00> : vector<8x32xf32>
    %75 = tpu.matmul %73, %74, %cst_23 {dimension_numbers = #tpu.dot_dimension_numbers<[1], [0], [0], [1], [0, 0, 1, 1], [], []>} : vector<8x8xbf16>, vector<8x32xbf16>, vector<8x32xf32> -> vector<8x32xf32>
    %76 = arith.addf %71, %75 : vector<8x32xf32>
    %77 = vector.extract_strided_slice %65 {offsets = [2, 0, 0], sizes = [1, 8, 8], strides = [1, 1, 1]} : vector<4x8x8xbf16> to vector<1x8x8xbf16>
    %78 = vector.shape_cast %77 : vector<1x8x8xbf16> to vector<8x8xbf16>
    %c16 = arith.constant 16 : index
    %c0_24 = arith.constant 0 : index
    %79 = vector.load %arg6[%c16, %c0_24] : memref<32x32xbf16, #tpu.memory_space<vmem>>, vector<8x32xbf16>
    %cst_25 = arith.constant dense<0.000000e+00> : vector<8x32xf32>
    %80 = tpu.matmul %78, %79, %cst_25 {dimension_numbers = #tpu.dot_dimension_numbers<[1], [0], [0], [1], [0, 0, 1, 1], [], []>} : vector<8x8xbf16>, vector<8x32xbf16>, vector<8x32xf32> -> vector<8x32xf32>
    %81 = arith.addf %76, %80 : vector<8x32xf32>
    %82 = vector.extract_strided_slice %65 {offsets = [3, 0, 0], sizes = [1, 8, 8], strides = [1, 1, 1]} : vector<4x8x8xbf16> to vector<1x8x8xbf16>
    %83 = vector.shape_cast %82 : vector<1x8x8xbf16> to vector<8x8xbf16>
    %c24 = arith.constant 24 : index
    %c0_26 = arith.constant 0 : index
    %84 = vector.load %arg6[%c24, %c0_26] : memref<32x32xbf16, #tpu.memory_space<vmem>>, vector<8x32xbf16>
    %cst_27 = arith.constant dense<0.000000e+00> : vector<8x32xf32>
    %85 = tpu.matmul %83, %84, %cst_27 {dimension_numbers = #tpu.dot_dimension_numbers<[1], [0], [0], [1], [0, 0, 1, 1], [], []>} : vector<8x8xbf16>, vector<8x32xbf16>, vector<8x32xf32> -> vector<8x32xf32>
    %86 = arith.addf %81, %85 : vector<8x32xf32>
    %c0_28 = arith.constant 0 : index
    %c0_29 = arith.constant 0 : index
    %87 = vector.load %arg7[%c0_28, %c0_29] : memref<1x32xf32, #tpu.memory_space<vmem>>, vector<1x32xf32>
    %88 = vector.broadcast %87 : vector<1x32xf32> to vector<8x32xf32>
    %89 = arith.addf %86, %88 : vector<8x32xf32>
    %90 = arith.addf %0, %89 : vector<8x32xf32>
    %c0_30 = arith.constant 0 : index
    %c0_31 = arith.constant 0 : index
    %91 = vector.load %arg8[%c0_30, %c0_31] : memref<1x32xf32, #tpu.memory_space<vmem>>, vector<1x32xf32>
    %c0_32 = arith.constant 0 : index
    %c0_33 = arith.constant 0 : index
    %92 = vector.load %arg9[%c0_32, %c0_33] : memref<1x32xf32, #tpu.memory_space<vmem>>, vector<1x32xf32>
    %cst_34 = arith.constant dense<0.000000e+00> : vector<8xf32>
    %93 = vector.multi_reduction <add>, %90, %cst_34 [1] : vector<8x32xf32> to vector<8xf32>
    %94 = vector.shape_cast %93 : vector<8xf32> to vector<8x1xf32>
    %cst_35 = arith.constant 3.200000e+01 : f32
    %95 = vector.broadcast %cst_35 : f32 to vector<8x1xf32>
    %96 = arith.divf %94, %95 : vector<8x1xf32>
    %97 = vector.broadcast %96 : vector<8x1xf32> to vector<8x32xf32>
    %98 = arith.subf %90, %97 : vector<8x32xf32>
    %99 = arith.mulf %98, %98 : vector<8x32xf32>
    %cst_36 = arith.constant dense<0.000000e+00> : vector<8xf32>
    %100 = vector.multi_reduction <add>, %99, %cst_36 [1] : vector<8x32xf32> to vector<8xf32>
    %101 = vector.shape_cast %100 : vector<8xf32> to vector<8x1xf32>
    %cst_37 = arith.constant 3.200000e+01 : f32
    %102 = vector.broadcast %cst_37 : f32 to vector<8x1xf32>
    %103 = arith.divf %101, %102 : vector<8x1xf32>
    %104 = vector.broadcast %96 : vector<8x1xf32> to vector<8x32xf32>
    %105 = arith.subf %90, %104 : vector<8x32xf32>
    %cst_38 = arith.constant 9.99999997E-7 : f32
    %106 = vector.broadcast %cst_38 : f32 to vector<8x1xf32>
    %107 = arith.addf %103, %106 : vector<8x1xf32>
    %108 = math.rsqrt %107 : vector<8x1xf32>
    %109 = vector.broadcast %108 : vector<8x1xf32> to vector<8x32xf32>
    %110 = arith.mulf %105, %109 : vector<8x32xf32>
    %111 = vector.broadcast %91 : vector<1x32xf32> to vector<8x32xf32>
    %112 = arith.mulf %110, %111 : vector<8x32xf32>
    %113 = vector.broadcast %92 : vector<1x32xf32> to vector<8x32xf32>
    %114 = arith.addf %112, %113 : vector<8x32xf32>
    %115 = arith.truncf %114 : vector<8x32xf32> to vector<8x32xbf16>
    %c0_39 = arith.constant 0 : index
    %c0_40 = arith.constant 0 : index
    %116 = vector.load %arg10[%c0_39, %c0_40] : memref<32x128xbf16, #tpu.memory_space<vmem>>, vector<32x128xbf16>
    %cst_41 = arith.constant dense<0.000000e+00> : vector<8x128xf32>
    %117 = tpu.matmul %115, %116, %cst_41 {dimension_numbers = #tpu.dot_dimension_numbers<[1], [0], [0], [1], [0, 0, 1, 1], [], []>} : vector<8x32xbf16>, vector<32x128xbf16>, vector<8x128xf32> -> vector<8x128xf32>
    %c0_42 = arith.constant 0 : index
    %c0_43 = arith.constant 0 : index
    %118 = vector.load %arg11[%c0_42, %c0_43] : memref<1x128xf32, #tpu.memory_space<vmem>>, vector<1x128xf32>
    %119 = vector.broadcast %118 : vector<1x128xf32> to vector<8x128xf32>
    %120 = arith.addf %117, %119 : vector<8x128xf32>
    %cst_44 = arith.constant 5.000000e-01 : f32
    %121 = vector.broadcast %cst_44 : f32 to vector<8x128xf32>
    %122 = arith.mulf %121, %120 : vector<8x128xf32>
    %cst_45 = arith.constant 0.707106769 : f32
    %123 = vector.broadcast %cst_45 : f32 to vector<8x128xf32>
    %124 = arith.mulf %120, %123 : vector<8x128xf32>
    %125 = math.erf %124 : vector<8x128xf32>
    %cst_46 = arith.constant 1.000000e+00 : f32
    %126 = vector.broadcast %cst_46 : f32 to vector<8x128xf32>
    %127 = arith.addf %126, %125 : vector<8x128xf32>
    %128 = arith.mulf %122, %127 : vector<8x128xf32>
    %129 = arith.truncf %128 : vector<8x128xf32> to vector<8x128xbf16>
    %c0_47 = arith.constant 0 : index
    %c0_48 = arith.constant 0 : index
    %130 = vector.load %arg12[%c0_47, %c0_48] : memref<128x32xbf16, #tpu.memory_space<vmem>>, vector<128x32xbf16>
    %cst_49 = arith.constant dense<0.000000e+00> : vector<8x32xf32>
    %131 = tpu.matmul %129, %130, %cst_49 {dimension_numbers = #tpu.dot_dimension_numbers<[1], [0], [0], [1], [0, 0, 1, 1], [], []>} : vector<8x128xbf16>, vector<128x32xbf16>, vector<8x32xf32> -> vector<8x32xf32>
    %c0_50 = arith.constant 0 : index
    %c0_51 = arith.constant 0 : index
    %132 = vector.load %arg13[%c0_50, %c0_51] : memref<1x32xf32, #tpu.memory_space<vmem>>, vector<1x32xf32>
    %133 = vector.broadcast %132 : vector<1x32xf32> to vector<8x32xf32>
    %134 = arith.addf %131, %133 : vector<8x32xf32>
    %135 = arith.addf %90, %134 : vector<8x32xf32>
    %c0_52 = arith.constant 0 : index
    %c0_53 = arith.constant 0 : index
    %136 = vector.load %arg14[%c0_52, %c0_53] : memref<8x32xf32, #tpu.memory_space<vmem>>, vector<8x32xf32>
    tpu.vector_store %arg14[%c0_52, %c0_53], %135 {strides = array<i32>} : memref<8x32xf32, #tpu.memory_space<vmem>>, vector<8x32xf32>,
    return
  }
  func.func @transform_0(%arg0: i32) -> (i32, i32) {
    %c0_i32 = arith.constant 0 : i32
    %c0_i32_0 = arith.constant 0 : i32
    return %arg0, %c0_i32 : i32, i32
  }
  func.func @transform_1(%arg0: i32) -> (i32, i32) {
    %c0_i32 = arith.constant 0 : i32
    %c0_i32_0 = arith.constant 0 : i32
    %c0_i32_1 = arith.constant 0 : i32
    return %c0_i32, %c0_i32_0 : i32, i32
  }
  func.func @transform_2(%arg0: i32) -> (i32, i32) {
    %c0_i32 = arith.constant 0 : i32
    %c0_i32_0 = arith.constant 0 : i32
    %c0_i32_1 = arith.constant 0 : i32
    return %c0_i32, %c0_i32_0 : i32, i32
  }
  func.func @transform_3(%arg0: i32) -> (i32, i32) {
    %c0_i32 = arith.constant 0 : i32
    %c0_i32_0 = arith.constant 0 : i32
    %c0_i32_1 = arith.constant 0 : i32
    return %c0_i32, %c0_i32_0 : i32, i32
  }
  func.func @transform_4(%arg0: i32) -> (i32, i32) {
    %c0_i32 = arith.constant 0 : i32
    %c0_i32_0 = arith.constant 0 : i32
    %c0_i32_1 = arith.constant 0 : i32
    return %c0_i32, %c0_i32_0 : i32, i32
  }
  func.func @transform_5(%arg0: i32) -> (i32, i32) {
    %c0_i32 = arith.constant 0 : i32
    %c0_i32_0 = arith.constant 0 : i32
    %c0_i32_1 = arith.constant 0 : i32
    return %c0_i32, %c0_i32_0 : i32, i32
  }
  func.func @transform_6(%arg0: i32) -> (i32, i32) {
    %c0_i32 = arith.constant 0 : i32
    %c0_i32_0 = arith.constant 0 : i32
    %c0_i32_1 = arith.constant 0 : i32
    return %c0_i32, %c0_i32_0 : i32, i32
  }
  func.func @transform_7(%arg0: i32) -> (i32, i32) {
    %c0_i32 = arith.constant 0 : i32
    %c0_i32_0 = arith.constant 0 : i32
    %c0_i32_1 = arith.constant 0 : i32
    return %c0_i32, %c0_i32_0 : i32, i32
  }
  func.func @transform_8(%arg0: i32) -> (i32, i32) {
    %c0_i32 = arith.constant 0 : i32
    %c0_i32_0 = arith.constant 0 : i32
    %c0_i32_1 = arith.constant 0 : i32
    return %c0_i32, %c0_i32_0 : i32, i32
  }
  func.func @transform_9(%arg0: i32) -> (i32, i32) {
    %c0_i32 = arith.constant 0 : i32
    %c0_i32_0 = arith.constant 0 : i32
    %c0_i32_1 = arith.constant 0 : i32
    return %c0_i32, %c0_i32_0 : i32, i32
  }
  func.func @transform_10(%arg0: i32) -> (i32, i32) {
    %c0_i32 = arith.constant 0 : i32
    %c0_i32_0 = arith.constant 0 : i32
    %c0_i32_1 = arith.constant 0 : i32
    return %c0_i32, %c0_i32_0 : i32, i32
  }
  func.func @transform_11(%arg0: i32) -> (i32, i32) {
    %c0_i32 = arith.constant 0 : i32
    %c0_i32_0 = arith.constant 0 : i32
    %c0_i32_1 = arith.constant 0 : i32
    return %c0_i32, %c0_i32_0 : i32, i32
  }
  func.func @transform_12(%arg0: i32) -> (i32, i32) {
    %c0_i32 = arith.constant 0 : i32
    %c0_i32_0 = arith.constant 0 : i32
    %c0_i32_1 = arith.constant 0 : i32
    return %c0_i32, %c0_i32_0 : i32, i32
  }
  func.func @transform_13(%arg0: i32) -> (i32, i32) {
    %c0_i32 = arith.constant 0 : i32
    %c0_i32_0 = arith.constant 0 : i32
    return %arg0, %c0_i32 : i32, i32
  }
}

module attributes {stable_mosaic.version = 11 : i64} {
  func.func @block_kernel(%arg0: i32, %arg1: memref<8x32xf32, #tpu.memory_space<vmem>>, %arg2: memref<1x32xf32, #tpu.memory_space<vmem>>, %arg3: memref<1x32xf32, #tpu.memory_space<vmem>>, %arg4: memref<32x96xbf16, #tpu.memory_space<vmem>>, %arg5: memref<1x96xf32, #tpu.memory_space<vmem>>, %arg6: memref<32x32xbf16, #tpu.memory_space<vmem>>, %arg7: memref<1x32xf32, #tpu.memory_space<vmem>>, %arg8: memref<1x32xf32, #tpu.memory_space<vmem>>, %arg9: memref<1x32xf32, #tpu.memory_space<vmem>>, %arg10: memref<32x128xbf16, #tpu.memory_space<vmem>>, %arg11: memref<1x128xf32, #tpu.memory_space<vmem>>, %arg12: memref<128x32xbf16, #tpu.memory_space<vmem>>, %arg13: memref<1x32xf32, #tpu.memory_space<vmem>>, %arg14: memref<8x32xf32, #tpu.memory_space<vmem>>) attributes {dimension_semantics = [#tpu.dimension_semantics<parallel>], iteration_bounds = array<i64: 2>, scalar_prefetch = 0 : i64, scratch_operands = 0 : i64, tpu.core_type = #tpu.core_type<tc>, window_params = [{transform_indices = @transform_0, window_bounds = array<i64: 8, 32>}, {pipeline_mode = #tpu.pipeline_mode<synchronous>, transform_indices = @transform_1, window_bounds = array<i64: 1, 32>}, {pipeline_mode = #tpu.pipeline_mode<synchronous>, transform_indices = @transform_2, window_bounds = array<i64: 1, 32>}, {pipeline_mode = #tpu.pipeline_mode<synchronous>, transform_indices = @transform_3, window_bounds = array<i64: 32, 96>}, {pipeline_mode = #tpu.pipeline_mode<synchronous>, transform_indices = @transform_4, window_bounds = array<i64: 1, 96>}, {pipeline_mode = #tpu.pipeline_mode<synchronous>, transform_indices = @transform_5, window_bounds = array<i64: 32, 32>}, {pipeline_mode = #tpu.pipeline_mode<synchronous>, transform_indices = @transform_6, window_bounds = array<i64: 1, 32>}, {pipeline_mode = #tpu.pipeline_mode<synchronous>, transform_indices = @transform_7, window_bounds = array<i64: 1, 32>}, {pipeline_mode = #tpu.pipeline_mode<synchronous>, transform_indices = @transform_8, window_bounds = array<i64: 1, 32>}, {pipeline_mode = #tpu.pipeline_mode<synchronous>, transform_indices = @transform_9, window_bounds = array<i64: 32, 128>}, {pipeline_mode = #tpu.pipeline_mode<synchronous>, transform_indices = @transform_10, window_bounds = array<i64: 1, 128>}, {pipeline_mode = #tpu.pipeline_mode<synchronous>, transform_indices = @transform_11, window_bounds = array<i64: 128, 32>}, {pipeline_mode = #tpu.pipeline_mode<synchronous>, transform_indices = @transform_12, window_bounds = array<i64: 1, 32>}, {transform_indices = @transform_13, window_bounds = array<i64: 8, 32>}]} {
    %c0 = arith.constant 0 : index
    %c0_0 = arith.constant 0 : index
    %0 = vector.load %arg1[%c0, %c0_0] : memref<8x32xf32, #tpu.memory_space<vmem>>, vector<8x32xf32>
    %c0_1 = arith.constant 0 : index
    %c0_2 = arith.constant 0 : index
    %1 = vector.load %arg2[%c0_1, %c0_2] : memref<1x32xf32, #tpu.memory_space<vmem>>, vector<1x32xf32>
    %c0_3 = arith.constant 0 : index
    %c0_4 = arith.constant 0 : index
    %2 = vector.load %arg3[%c0_3, %c0_4] : memref<1x32xf32, #tpu.memory_space<vmem>>, vector<1x32xf32>
    %cst = arith.constant dense<0.000000e+00> : vector<8xf32>
    %3 = vector.multi_reduction <add>, %0, %cst [1] : vector<8x32xf32> to vector<8xf32>
    %4 = vector.shape_cast %3 : vector<8xf32> to vector<8x1xf32>
    %cst_5 = arith.constant 3.200000e+01 : f32
    %5 = vector.broadcast %cst_5 : f32 to vector<8x1xf32>
    %6 = arith.divf %4, %5 : vector<8x1xf32>
    %7 = vector.broadcast %6 : vector<8x1xf32> to vector<8x32xf32>
    %8 = arith.subf %0, %7 : vector<8x32xf32>
    %9 = arith.mulf %8, %8 : vector<8x32xf32>
    %cst_6 = arith.constant dense<0.000000e+00> : vector<8xf32>
    %10 = vector.multi_reduction <add>, %9, %cst_6 [1] : vector<8x32xf32> to vector<8xf32>
    %11 = vector.shape_cast %10 : vector<8xf32> to vector<8x1xf32>
    %cst_7 = arith.constant 3.200000e+01 : f32
    %12 = vector.broadcast %cst_7 : f32 to vector<8x1xf32>
    %13 = arith.divf %11, %12 : vector<8x1xf32>
    %14 = vector.broadcast %6 : vector<8x1xf32> to vector<8x32xf32>
    %15 = arith.subf %0, %14 : vector<8x32xf32>
    %cst_8 = arith.constant 9.99999997E-7 : f32
    %16 = vector.broadcast %cst_8 : f32 to vector<8x1xf32>
    %17 = arith.addf %13, %16 : vector<8x1xf32>
    %18 = math.rsqrt %17 : vector<8x1xf32>
    %19 = vector.broadcast %18 : vector<8x1xf32> to vector<8x32xf32>
    %20 = arith.mulf %15, %19 : vector<8x32xf32>
    %21 = vector.broadcast %1 : vector<1x32xf32> to vector<8x32xf32>
    %22 = arith.mulf %20, %21 : vector<8x32xf32>
    %23 = vector.broadcast %2 : vector<1x32xf32> to vector<8x32xf32>
    %24 = arith.addf %22, %23 : vector<8x32xf32>
    %25 = arith.truncf %24 : vector<8x32xf32> to vector<8x32xbf16>
    %c0_9 = arith.constant 0 : index
    %c0_10 = arith.constant 0 : index
    %26 = vector.load %arg4[%c0_9, %c0_10] : memref<32x96xbf16, #tpu.memory_space<vmem>>, vector<32x96xbf16>
    %cst_11 = arith.constant dense<0.000000e+00> : vector<8x96xf32>
    %27 = tpu.matmul %25, %26, %cst_11 {dimension_numbers = #tpu.dot_dimension_numbers<[1], [0], [0], [1], [0, 0, 1, 1], [], []>} : vector<8x32xbf16>, vector<32x96xbf16>, vector<8x96xf32> -> vector<8x96xf32>
    %c0_12 = arith.constant 0 : index
    %c0_13 = arith.constant 0 : index
    %28 = vector.load %arg5[%c0_12, %c0_13] : memref<1x96xf32, #tpu.memory_space<vmem>>, vector<1x96xf32>
    %29 = vector.broadcast %28 : vector<1x96xf32> to vector<8x96xf32>
    %30 = arith.addf %27, %29 : vector<8x96xf32>
    %31 = vector.extract_strided_slice %30 {offsets = [0, 0], sizes = [8, 8], strides = [1, 1]} : vector<8x96xf32> to vector<8x8xf32>
    %32 = vector.extract_strided_slice %30 {offsets = [0, 8], sizes = [8, 8], strides = [1, 1]} : vector<8x96xf32> to vector<8x8xf32>
    %33 = vector.extract_strided_slice %30 {offsets = [0, 16], sizes = [8, 8], strides = [1, 1]} : vector<8x96xf32> to vector<8x8xf32>
    %34 = vector.extract_strided_slice %30 {offsets = [0, 24], sizes = [8, 8], strides = [1, 1]} : vector<8x96xf32> to vector<8x8xf32>
    %35 = tpu.concatenate %31, %32, %33, %34 in 0 : vector<8x8xf32>, vector<8x8xf32>, vector<8x8xf32>, vector<8x8xf32> -> vector<32x8xf32>
    %36 = vector.shape_cast %35 : vector<32x8xf32> to vector<4x8x8xf32>
    %37 = arith.truncf %36 : vector<4x8x8xf32> to vector<4x8x8xbf16>
    %38 = vector.extract_strided_slice %30 {offsets = [0, 32], sizes = [8, 8], strides = [1, 1]} : vector<8x96xf32> to vector<8x8xf32>
    %39 = vector.extract_strided_slice %30 {offsets = [0, 40], sizes = [8, 8], strides = [1, 1]} : vector<8x96xf32> to vector<8x8xf32>
    %40 = vector.extract_strided_slice %30 {offsets = [0, 48], sizes = [8, 8], strides = [1, 1]} : vector<8x96xf32> to vector<8x8xf32>
    %41 = vector.extract_strided_slice %30 {offsets = [0, 56], sizes = [8, 8], strides = [1, 1]} : vector<8x96xf32> to vector<8x8xf32>
    %42 = tpu.concatenate %38, %39, %40, %41 in 0 : vector<8x8xf32>, vector<8x8xf32>, vector<8x8xf32>, vector<8x8xf32> -> vector<32x8xf32>
    %43 = vector.shape_cast %42 : vector<32x8xf32> to vector<4x8x8xf32>
    %44 = arith.truncf %43 : vector<4x8x8xf32> to vector<4x8x8xbf16>
    %45 = vector.extract_strided_slice %30 {offsets = [0, 64], sizes = [8, 8], strides = [1, 1]} : vector<8x96xf32> to vector<8x8xf32>
    %46 = vector.extract_strided_slice %30 {offsets = [0, 72], sizes = [8, 8], strides = [1, 1]} : vector<8x96xf32> to vector<8x8xf32>
    %47 = vector.extract_strided_slice %30 {offsets = [0, 80], sizes = [8, 8], strides = [1, 1]} : vector<8x96xf32> to vector<8x8xf32>
    %48 = vector.extract_strided_slice %30 {offsets = [0, 88], sizes = [8, 8], strides = [1, 1]} : vector<8x96xf32> to vector<8x8xf32>
    %49 = tpu.concatenate %45, %46, %47, %48 in 0 : vector<8x8xf32>, vector<8x8xf32>, vector<8x8xf32>, vector<8x8xf32> -> vector<32x8xf32>
    %50 = vector.shape_cast %49 : vector<32x8xf32> to vector<4x8x8xf32>
    %51 = arith.truncf %50 : vector<4x8x8xf32> to vector<4x8x8xbf16>
    "tpu.trace_start"() <{level = 10 : i32, message = "bqd,bkd->bqk"}> : () -> ()
    %cst_14 = arith.constant dense<0.000000e+00> : vector<4x8x8xf32>
    %52 = tpu.matmul %37, %44, %cst_14 {dimension_numbers = #tpu.dot_dimension_numbers<[2], [2], [1], [1], [0, 0, 0, 1, 1, 1], [0], [0]>} : vector<4x8x8xbf16>, vector<4x8x8xbf16>, vector<4x8x8xf32> -> vector<4x8x8xf32>
    "tpu.trace_stop"() : () -> ()
    %cst_15 = arith.constant dense<0xFF800000> : vector<4x8xf32>
    %53 = vector.multi_reduction <maximumf>, %52, %cst_15 [2] : vector<4x8x8xf32> to vector<4x8xf32>
    %54 = vector.shape_cast %53 : vector<4x8xf32> to vector<4x8x1xf32>
    %55 = vector.broadcast %54 : vector<4x8x1xf32> to vector<4x8x8xf32>
    %56 = arith.subf %52, %55 : vector<4x8x8xf32>
    %57 = math.exp %56 : vector<4x8x8xf32>
    %cst_16 = arith.constant dense<0.000000e+00> : vector<4x8xf32>
    %58 = vector.multi_reduction <add>, %57, %cst_16 [2] : vector<4x8x8xf32> to vector<4x8xf32>
    %59 = vector.shape_cast %58 : vector<4x8xf32> to vector<4x8x1xf32>
    %60 = tpu.reciprocal %59 {approx = true} : vector<4x8x1xf32> -> vector<4x8x1xf32>
    %61 = vector.broadcast %60 : vector<4x8x1xf32> to vector<4x8x8xf32>
    %62 = arith.mulf %57, %61 : vector<4x8x8xf32>
    %63 = arith.truncf %62 : vector<4x8x8xf32> to vector<4x8x8xbf16>
    "tpu.trace_start"() <{level = 10 : i32, message = "bqk,bkd->bqd"}> : () -> ()
    %cst_17 = arith.constant dense<0.000000e+00> : vector<4x8x8xf32>
    %64 = tpu.matmul %63, %51, %cst_17 {dimension_numbers = #tpu.dot_dimension_numbers<[2], [1], [1], [2], [0, 0, 0, 1, 1, 2], [0], [0]>} : vector<4x8x8xbf16>, vector<4x8x8xbf16>, vector<4x8x8xf32> -> vector<4x8x8xf32>
    "tpu.trace_stop"() : () -> ()
    %65 = arith.truncf %64 : vector<4x8x8xf32> to vector<4x8x8xbf16>
    %cst_18 = arith.constant 0.000000e+00 : f32
    %66 = vector.broadcast %cst_18 : f32 to vector<8x32xf32>
    %67 = vector.extract_strided_slice %65 {offsets = [0, 0, 0], sizes = [1, 8, 8], strides = [1, 1, 1]} : vector<4x8x8xbf16> to vector<1x8x8xbf16>
    %68 = vector.shape_cast %67 : vector<1x8x8xbf16> to vector<8x8xbf16>
    %c0_19 = arith.constant 0 : index
    %c0_20 = arith.constant 0 : index
    %69 = vector.load %arg6[%c0_19, %c0_20] : memref<32x32xbf16, #tpu.memory_space<vmem>>, vector<8x32xbf16>
    %cst_21 = arith.constant dense<0.000000e+00> : vector<8x32xf32>
    %70 = tpu.matmul %68, %69, %cst_21 {dimension_numbers = #tpu.dot_dimension_numbers<[1], [0], [0], [1], [0, 0, 1, 1], [], []>} : vector<8x8xbf16>, vector<8x32xbf16>, vector<8x32xf32> -> vector<8x32xf32>
    %71 = arith.addf %66, %70 : vector<8x32xf32>
    %72 = vector.extract_strided_slice %65 {offsets = [1, 0, 0], sizes = [1, 8, 8], strides = [1, 1, 1]} : vector<4x8x8xbf16> to vector<1x8x8xbf16>
    %73 = vector.shape_cast %72 : vector<1x8x8xbf16> to vector<8x8xbf16>
    %c8 = arith.constant 8 : index
    %c0_22 = arith.constant 0 : index
    %74 = vector.load %arg6[%c8, %c0_22] : memref<32x32xbf16, #tpu.memory_space<vmem>>, vector<8x32xbf16>
    %cst_23 = arith.constant dense<0.000000e+00> : vector<8x32xf32>
    %75 = tpu.matmul %73, %74, %cst_23 {dimension_numbers = #tpu.dot_dimension_numbers<[1], [0], [0], [1], [0, 0, 1, 1], [], []>} : vector<8x8xbf16>, vector<8x32xbf16>, vector<8x32xf32> -> vector<8x32xf32>
    %76 = arith.addf %71, %75 : vector<8x32xf32>
    %77 = vector.extract_strided_slice %65 {offsets = [2, 0, 0], sizes = [1, 8, 8], strides = [1, 1, 1]} : vector<4x8x8xbf16> to vector<1x8x8xbf16>
    %78 = vector.shape_cast %77 : vector<1x8x8xbf16> to vector<8x8xbf16>
    %c16 = arith.constant 16 : index
    %c0_24 = arith.constant 0 : index
    %79 = vector.load %arg6[%c16, %c0_24] : memref<32x32xbf16, #tpu.memory_space<vmem>>, vector<8x32xbf16>
    %cst_25 = arith.constant dense<0.000000e+00> : vector<8x32xf32>
    %80 = tpu.matmul %78, %79, %cst_25 {dimension_numbers = #tpu.dot_dimension_numbers<[1], [0], [0], [1], [0, 0, 1, 1], [], []>} : vector<8x8xbf16>, vector<8x32xbf16>, vector<8x32xf32> -> vector<8x32xf32>
    %81 = arith.addf %76, %80 : vector<8x32xf32>
    %82 = vector.extract_strided_slice %65 {offsets = [3, 0, 0], sizes = [1, 8, 8], strides = [1, 1, 1]} : vector<4x8x8xbf16> to vector<1x8x8xbf16>
    %83 = vector.shape_cast %82 : vector<1x8x8xbf16> to vector<8x8xbf16>
    %c24 = arith.constant 24 : index
    %c0_26 = arith.constant 0 : index
    %84 = vector.load %arg6[%c24, %c0_26] : memref<32x32xbf16, #tpu.memory_space<vmem>>, vector<8x32xbf16>
    %cst_27 = arith.constant dense<0.000000e+00> : vector<8x32xf32>
    %85 = tpu.matmul %83, %84, %cst_27 {dimension_numbers = #tpu.dot_dimension_numbers<[1], [0], [0], [1], [0, 0, 1, 1], [], []>} : vector<8x8xbf16>, vector<8x32xbf16>, vector<8x32xf32> -> vector<8x32xf32>
    %86 = arith.addf %81, %85 : vector<8x32xf32>
    %c0_28 = arith.constant 0 : index
    %c0_29 = arith.constant 0 : index
    %87 = vector.load %arg7[%c0_28, %c0_29] : memref<1x32xf32, #tpu.memory_space<vmem>>, vector<1x32xf32>
    %88 = vector.broadcast %87 : vector<1x32xf32> to vector<8x32xf32>
    %89 = arith.addf %86, %88 : vector<8x32xf32>
    %90 = arith.addf %0, %89 : vector<8x32xf32>
    %c0_30 = arith.constant 0 : index
    %c0_31 = arith.constant 0 : index
    %91 = vector.load %arg8[%c0_30, %c0_31] : memref<1x32xf32, #tpu.memory_space<vmem>>, vector<1x32xf32>
    %c0_32 = arith.constant 0 : index
    %c0_33 = arith.constant 0 : index
    %92 = vector.load %arg9[%c0_32, %c0_33] : memref<1x32xf32, #tpu.memory_space<vmem>>, vector<1x32xf32>
    %cst_34 = arith.constant dense<0.000000e+00> : vector<8xf32>
    %93 = vector.multi_reduction <add>, %90, %cst_34 [1] : vector<8x32xf32> to vector<8xf32>
    %94 = vector.shape_cast %93 : vector<8xf32> to vector<8x1xf32>
    %cst_35 = arith.constant 3.200000e+01 : f32
    %95 = vector.broadcast %cst_35 : f32 to vector<8x1xf32>
    %96 = arith.divf %94, %95 : vector<8x1xf32>
    %97 = vector.broadcast %96 : vector<8x1xf32> to vector<8x32xf32>
    %98 = arith.subf %90, %97 : vector<8x32xf32>
    %99 = arith.mulf %98, %98 : vector<8x32xf32>
    %cst_36 = arith.constant dense<0.000000e+00> : vector<8xf32>
    %100 = vector.multi_reduction <add>, %99, %cst_36 [1] : vector<8x32xf32> to vector<8xf32>
    %101 = vector.shape_cast %100 : vector<8xf32> to vector<8x1xf32>
    %cst_37 = arith.constant 3.200000e+01 : f32
    %102 = vector.broadcast %cst_37 : f32 to vector<8x1xf32>
    %103 = arith.divf %101, %102 : vector<8x1xf32>
    %104 = vector.broadcast %96 : vector<8x1xf32> to vector<8x32xf32>
    %105 = arith.subf %90, %104 : vector<8x32xf32>
    %cst_38 = arith.constant 9.99999997E-7 : f32
    %106 = vector.broadcast %cst_38 : f32 to vector<8x1xf32>
    %107 = arith.addf %103, %106 : vector<8x1xf32>
    %108 = math.rsqrt %107 : vector<8x1xf32>
    %109 = vector.broadcast %108 : vector<8x1xf32> to vector<8x32xf32>
    %110 = arith.mulf %105, %109 : vector<8x32xf32>
    %111 = vector.broadcast %91 : vector<1x32xf32> to vector<8x32xf32>
    %112 = arith.mulf %110, %111 : vector<8x32xf32>
    %113 = vector.broadcast %92 : vector<1x32xf32> to vector<8x32xf32>
    %114 = arith.addf %112, %113 : vector<8x32xf32>
    %115 = arith.truncf %114 : vector<8x32xf32> to vector<8x32xbf16>
    %c0_39 = arith.constant 0 : index
    %c0_40 = arith.constant 0 : index
    %116 = vector.load %arg10[%c0_39, %c0_40] : memref<32x128xbf16, #tpu.memory_space<vmem>>, vector<32x128xbf16>
    %cst_41 = arith.constant dense<0.000000e+00> : vector<8x128xf32>
    %117 = tpu.matmul %115, %116, %cst_41 {dimension_numbers = #tpu.dot_dimension_numbers<[1], [0], [0], [1], [0, 0, 1, 1], [], []>} : vector<8x32xbf16>, vector<32x128xbf16>, vector<8x128xf32> -> vector<8x128xf32>
    %c0_42 = arith.constant 0 : index
    %c0_43 = arith.constant 0 : index
    %118 = vector.load %arg11[%c0_42, %c0_43] : memref<1x128xf32, #tpu.memory_space<vmem>>, vector<1x128xf32>
    %119 = vector.broadcast %118 : vector<1x128xf32> to vector<8x128xf32>
    %120 = arith.addf %117, %119 : vector<8x128xf32>
    %cst_44 = arith.constant 5.000000e-01 : f32
    %121 = vector.broadcast %cst_44 : f32 to vector<8x128xf32>
    %122 = arith.mulf %121, %120 : vector<8x128xf32>
    %cst_45 = arith.constant 0.707106769 : f32
    %123 = vector.broadcast %cst_45 : f32 to vector<8x128xf32>
    %124 = arith.mulf %120, %123 : vector<8x128xf32>
    %125 = math.erf %124 : vector<8x128xf32>
    %cst_46 = arith.constant 1.000000e+00 : f32
    %126 = vector.broadcast %cst_46 : f32 to vector<8x128xf32>
    %127 = arith.addf %126, %125 : vector<8x128xf32>
    %128 = arith.mulf %122, %127 : vector<8x128xf32>
    %129 = arith.truncf %128 : vector<8x128xf32> to vector<8x128xbf16>
    %c0_47 = arith.constant 0 : index
    %c0_48 = arith.constant 0 : index
    %130 = vector.load %arg12[%c0_47, %c0_48] : memref<128x32xbf16, #tpu.memory_space<vmem>>, vector<128x32xbf16>
    %cst_49 = arith.constant dense<0.000000e+00> : vector<8x32xf32>
    %131 = tpu.matmul %129, %130, %cst_49 {dimension_numbers = #tpu.dot_dimension_numbers<[1], [0], [0], [1], [0, 0, 1, 1], [], []>} : vector<8x128xbf16>, vector<128x32xbf16>, vector<8x32xf32> -> vector<8x32xf32>
    %c0_50 = arith.constant 0 : index
    %c0_51 = arith.constant 0 : index
    %132 = vector.load %arg13[%c0_50, %c0_51] : memref<1x32xf32, #tpu.memory_space<vmem>>, vector<1x32xf32>
    %133 = vector.broadcast %132 : vector<1x32xf32> to vector<8x32xf32>
    %134 = arith.addf %131, %133 : vector<8x32xf32>
    %135 = arith.addf %90, %134 : vector<8x32xf32>
    %c0_52 = arith.constant 0 : index
    %c0_53 = arith.constant 0 : index
    %136 = vector.load %arg14[%c0_52, %c0_53] : memref<8x32xf32, #tpu.memory_space<vmem>>, vector<8x32xf32>
    tpu.vector_store %arg14[%c0_52, %c0_53], %135 {strides = array<i32>} : memref<8x32xf32, #tpu.memory_space<vmem>>, vector<8x32xf32>,
    return
  }
  func.func @transform_0(%arg0: i32) -> (i32, i32) {
    %c0_i32 = arith.constant 0 : i32
    %c0_i32_0 = arith.constant 0 : i32
    return %arg0, %c0_i32 : i32, i32
  }
  func.func @transform_1(%arg0: i32) -> (i32, i32) {
    %c0_i32 = arith.constant 0 : i32
    %c0_i32_0 = arith.constant 0 : i32
    %c0_i32_1 = arith.constant 0 : i32
    return %c0_i32, %c0_i32_0 : i32, i32
  }
  func.func @transform_2(%arg0: i32) -> (i32, i32) {
    %c0_i32 = arith.constant 0 : i32
    %c0_i32_0 = arith.constant 0 : i32
    %c0_i32_1 = arith.constant 0 : i32
    return %c0_i32, %c0_i32_0 : i32, i32
  }
  func.func @transform_3(%arg0: i32) -> (i32, i32) {
    %c0_i32 = arith.constant 0 : i32
    %c0_i32_0 = arith.constant 0 : i32
    %c0_i32_1 = arith.constant 0 : i32
    return %c0_i32, %c0_i32_0 : i32, i32
  }
  func.func @transform_4(%arg0: i32) -> (i32, i32) {
    %c0_i32 = arith.constant 0 : i32
    %c0_i32_0 = arith.constant 0 : i32
    %c0_i32_1 = arith.constant 0 : i32
    return %c0_i32, %c0_i32_0 : i32, i32
  }
  func.func @transform_5(%arg0: i32) -> (i32, i32) {
    %c0_i32 = arith.constant 0 : i32
    %c0_i32_0 = arith.constant 0 : i32
    %c0_i32_1 = arith.constant 0 : i32
    return %c0_i32, %c0_i32_0 : i32, i32
  }
  func.func @transform_6(%arg0: i32) -> (i32, i32) {
    %c0_i32 = arith.constant 0 : i32
    %c0_i32_0 = arith.constant 0 : i32
    %c0_i32_1 = arith.constant 0 : i32
    return %c0_i32, %c0_i32_0 : i32, i32
  }
  func.func @transform_7(%arg0: i32) -> (i32, i32) {
    %c0_i32 = arith.constant 0 : i32
    %c0_i32_0 = arith.constant 0 : i32
    %c0_i32_1 = arith.constant 0 : i32
    return %c0_i32, %c0_i32_0 : i32, i32
  }
  func.func @transform_8(%arg0: i32) -> (i32, i32) {
    %c0_i32 = arith.constant 0 : i32
    %c0_i32_0 = arith.constant 0 : i32
    %c0_i32_1 = arith.constant 0 : i32
    return %c0_i32, %c0_i32_0 : i32, i32
  }
  func.func @transform_9(%arg0: i32) -> (i32, i32) {
    %c0_i32 = arith.constant 0 : i32
    %c0_i32_0 = arith.constant 0 : i32
    %c0_i32_1 = arith.constant 0 : i32
    return %c0_i32, %c0_i32_0 : i32, i32
  }
  func.func @transform_10(%arg0: i32) -> (i32, i32) {
    %c0_i32 = arith.constant 0 : i32
    %c0_i32_0 = arith.constant 0 : i32
    %c0_i32_1 = arith.constant 0 : i32
    return %c0_i32, %c0_i32_0 : i32, i32
  }
  func.func @transform_11(%arg0: i32) -> (i32, i32) {
    %c0_i32 = arith.constant 0 : i32
    %c0_i32_0 = arith.constant 0 : i32
    %c0_i32_1 = arith.constant 0 : i32
    return %c0_i32, %c0_i32_0 : i32, i32
  }
  func.func @transform_12(%arg0: i32) -> (i32, i32) {
    %c0_i32 = arith.constant 0 : i32
    %c0_i32_0 = arith.constant 0 : i32
    %c0_i32_1 = arith.constant 0 : i32
    return %c0_i32, %c0_i32_0 : i32, i32
  }
  func.func @transform_13(%arg0: i32) -> (i32, i32) {
    %c0_i32 = arith.constant 0 : i32
    %c0_i32_0 = arith.constant 0 : i32
    return %arg0, %c0_i32 : i32, i32
  }
}

</mosaic_0001>

<llo_original>
// kernel: tpu_custom_call.1
$region0: #{tpu_custom_call.1}
  #allocation0 [shape = 'u32[]', space=smem, size = 0x4, offset = 0x4, fixed_abs, tag = 'smem constant byte address 0x4 - core index']
  #allocation1 [shape = 'u32[72,128]{1,0:T(1,128)}', space=vmem, size = 0x9000, scoped, tag = 'internal scratch']
  %s0 = inlined_call_operand.vmem [shape: f32[16,32], index: 0, kind: input, shape index: {}]
  %s1 = inlined_call_operand.vmem [shape: f32[1,32], index: 1, kind: input, shape index: {}]
  %s2 = inlined_call_operand.vmem [shape: f32[1,32], index: 2, kind: input, shape index: {}]
  %s3 = inlined_call_operand.vmem [shape: bf16[32,96], index: 3, kind: input, shape index: {}]
  %s4 = inlined_call_operand.vmem [shape: f32[1,96], index: 4, kind: input, shape index: {}]
  %s5 = inlined_call_operand.vmem [shape: bf16[32,32], index: 5, kind: input, shape index: {}]
  %s6 = inlined_call_operand.vmem [shape: f32[1,32], index: 6, kind: input, shape index: {}]
  %s7 = inlined_call_operand.vmem [shape: f32[1,32], index: 7, kind: input, shape index: {}]
  %s8 = inlined_call_operand.vmem [shape: f32[1,32], index: 8, kind: input, shape index: {}]
  %s9 = inlined_call_operand.vmem [shape: bf16[32,128], index: 9, kind: input, shape index: {}]
  %s10 = inlined_call_operand.vmem [shape: f32[1,128], index: 10, kind: input, shape index: {}]
  %s11 = inlined_call_operand.vmem [shape: bf16[128,32], index: 11, kind: input, shape index: {}]
  %s12 = inlined_call_operand.vmem [shape: f32[1,32], index: 12, kind: input, shape index: {}]
  %s13 = inlined_call_operand.hbm [shape: f32[16,32], index: 13, kind: output, shape index: {}]
  %s14 = sld [smem:[#allocation0]]
  $region85: #{tpu_custom_call.1} parent=0
    _
  %s16 = ssub.s32 1, %s14
  %s17 = scalar_select 0, %s16, %s14
  $region1: #{tpu_custom_call.1} parent=0
    #allocation2 [shape = 'u8[8192]{0}', space=vmem, size = 0x2000, scoped, tag = 'output window, operand 0']
    #allocation3 [shape = 's32[2]{0}', space=sflag, size = 0x8, scoped, tag = 'scoped memory for tpu_custom_call.1']
    %18 = vsyncpa [#allocation3], 0
    %s19 = scalar_lea.sflag [#allocation3], 1
    %20 = vsyncpa %s19, 0
    loop: start=0, step=1, limit=4
    $region2: #{tpu_custom_call.1} parent=1 // loop_pre_header
      _
    $region3: #{tpu_custom_call.1} parent=1 // loop_header
      %s22 = sphi 0, %s26
      %p23 = scmp.ge.s32.totalorder %s22, 4
      %s32 = sphi 0, %s34
      %s35 = sphi 0, %s32
      %s36 = sphi 0, %s35
      %s52 = sphi 0, %s36
      %s56 = sphi 0, %s56
      %s58 = sphi 0, %s56
      %s59 = sphi 0, %s58
      %s73 = sphi 0, %s59
      %s77 = sphi 0, %s77
      %s79 = sphi 0, %s77
      %s80 = sphi 0, %s79
      %s94 = sphi 0, %s80
      %s98 = sphi 0, %s98
      %s100 = sphi 0, %s98
      %s101 = sphi 0, %s100
      %s115 = sphi 0, %s101
      %s119 = sphi 0, %s119
      %s121 = sphi 0, %s119
      %s122 = sphi 0, %s121
      %s136 = sphi 0, %s122
      %s140 = sphi 0, %s140
      %s142 = sphi 0, %s140
      %s143 = sphi 0, %s142
      %s157 = sphi 0, %s143
      %s161 = sphi 0, %s161
      %s163 = sphi 0, %s161
      %s164 = sphi 0, %s163
      %s178 = sphi 0, %s164
      %s182 = sphi 0, %s182
      %s184 = sphi 0, %s182
      %s185 = sphi 0, %s184
      %s199 = sphi 0, %s185
      %s203 = sphi 0, %s203
      %s205 = sphi 0, %s203
      %s206 = sphi 0, %s205
      %s220 = sphi 0, %s206
      %s224 = sphi 0, %s224
      %s226 = sphi 0, %s224
      %s227 = sphi 0, %s226
      %s241 = sphi 0, %s227
      %s245 = sphi 0, %s245
      %s247 = sphi 0, %s245
      %s248 = sphi 0, %s247
      %s262 = sphi 0, %s248
      %s266 = sphi 0, %s266
      %s268 = sphi 0, %s266
      %s269 = sphi 0, %s268
      %s283 = sphi 0, %s269
      %s287 = sphi 0, %s287
      %s289 = sphi 0, %s287
      %s290 = sphi 0, %s289
      %s304 = sphi 0, %s290
      %s310 = sphi 0, %s312
      %s313 = sphi 0, %s310
      %s314 = sphi 0, %s313
      %s330 = sphi 0, %s314
    $region4: #{tpu_custom_call.1} parent=1 // loop_header_branch
      %25 = sbr.rel (%p23) target = $region8
    $region5: #{tpu_custom_call.1} parent=1 // loop_body
      %s27 = ssub.s32 %s22, 1
      %s28 = ssub.s32 %s22, 2
      %s29 = sadd.s32 %s22, 1
      %s30 = ssub.s32 %s22, %s29
      %p31 = scmp.eq.s32.totalorder %s30, 0
      %s33 = sadd.s32 %s32, 1
      %s34 = scalar_select %p31, %s32, %s33
      %p37 = pneg %p31
      %p38 = scmp.eq.s32.totalorder %s22, 1
      %p39 = por %p37, %p38
      %p40 = scmp.ne.s32.totalorder %s32, %s35
      %p41 = scmp.eq.s32.totalorder %s22, 0
      %p42 = por %p40, %p41
      %p43 = scmp.ne.s32.totalorder %s32, %s35
      %p44 = scmp.eq.s32.totalorder %s27, 1
      %p45 = por %p43, %p44
      %p46 = scmp.ne.s32.totalorder %s35, %s36
      %p47 = scmp.eq.s32.totalorder %s27, 0
      %p48 = por %p46, %p47
      %p49 = scmp.ne.s32.totalorder %s35, %s36
      %p50 = scmp.eq.s32.totalorder %s28, 1
      %p51 = por %p49, %p50
      %p53 = scmp.ne.s32.totalorder %s36, %s52
      %p54 = scmp.eq.s32.totalorder %s28, 0
      %p55 = por %p53, %p54
      %s57 = sadd.s32 %s56, 1
      %p60 = scmp.eq.s32.totalorder %s22, 1
      %p61 = scmp.ne.s32.totalorder %s56, %s58
      %p62 = scmp.eq.s32.totalorder %s22, 0
      %p63 = por %p61, %p62
      %p64 = scmp.ne.s32.totalorder %s56, %s58
      %p65 = scmp.eq.s32.totalorder %s27, 1
      %p66 = por %p64, %p65
      %p67 = scmp.ne.s32.totalorder %s58, %s59
      %p68 = scmp.eq.s32.totalorder %s27, 0
      %p69 = por %p67, %p68
      %p70 = scmp.ne.s32.totalorder %s58, %s59
      %p71 = scmp.eq.s32.totalorder %s28, 1
      %p72 = por %p70, %p71
      %p74 = scmp.ne.s32.totalorder %s59, %s73
      %p75 = scmp.eq.s32.totalorder %s28, 0
      %p76 = por %p74, %p75
      %s78 = sadd.s32 %s77, 1
      %p81 = scmp.eq.s32.totalorder %s22, 1
      %p82 = scmp.ne.s32.totalorder %s77, %s79
      %p83 = scmp.eq.s32.totalorder %s22, 0
      %p84 = por %p82, %p83
      %p85 = scmp.ne.s32.totalorder %s77, %s79
      %p86 = scmp.eq.s32.totalorder %s27, 1
      %p87 = por %p85, %p86
      %p88 = scmp.ne.s32.totalorder %s79, %s80
      %p89 = scmp.eq.s32.totalorder %s27, 0
      %p90 = por %p88, %p89
      %p91 = scmp.ne.s32.totalorder %s79, %s80
      %p92 = scmp.eq.s32.totalorder %s28, 1
      %p93 = por %p91, %p92
      %p95 = scmp.ne.s32.totalorder %s80, %s94
      %p96 = scmp.eq.s32.totalorder %s28, 0
      %p97 = por %p95, %p96
      %s99 = sadd.s32 %s98, 1
      %p102 = scmp.eq.s32.totalorder %s22, 1
      %p103 = scmp.ne.s32.totalorder %s98, %s100
      %p104 = scmp.eq.s32.totalorder %s22, 0
      %p105 = por %p103, %p104
      %p106 = scmp.ne.s32.totalorder %s98, %s100
      %p107 = scmp.eq.s32.totalorder %s27, 1
      %p108 = por %p106, %p107
      %p109 = scmp.ne.s32.totalorder %s100, %s101
      %p110 = scmp.eq.s32.totalorder %s27, 0
      %p111 = por %p109, %p110
      %p112 = scmp.ne.s32.totalorder %s100, %s101
      %p113 = scmp.eq.s32.totalorder %s28, 1
      %p114 = por %p112, %p113
      %p116 = scmp.ne.s32.totalorder %s101, %s115
      %p117 = scmp.eq.s32.totalorder %s28, 0
      %p118 = por %p116, %p117
      %s120 = sadd.s32 %s119, 1
      %p123 = scmp.eq.s32.totalorder %s22, 1
      %p124 = scmp.ne.s32.totalorder %s119, %s121
      %p125 = scmp.eq.s32.totalorder %s22, 0
      %p126 = por %p124, %p125
      %p127 = scmp.ne.s32.totalorder %s119, %s121
      %p128 = scmp.eq.s32.totalorder %s27, 1
      %p129 = por %p127, %p128
      %p130 = scmp.ne.s32.totalorder %s121, %s122
      %p131 = scmp.eq.s32.totalorder %s27, 0
      %p132 = por %p130, %p131
      %p133 = scmp.ne.s32.totalorder %s121, %s122
      %p134 = scmp.eq.s32.totalorder %s28, 1
      %p135 = por %p133, %p134
      %p137 = scmp.ne.s32.totalorder %s122, %s136
      %p138 = scmp.eq.s32.totalorder %s28, 0
      %p139 = por %p137, %p138
      %s141 = sadd.s32 %s140, 1
      %p144 = scmp.eq.s32.totalorder %s22, 1
      %p145 = scmp.ne.s32.totalorder %s140, %s142
      %p146 = scmp.eq.s32.totalorder %s22, 0
      %p147 = por %p145, %p146
      %p148 = scmp.ne.s32.totalorder %s140, %s142
      %p149 = scmp.eq.s32.totalorder %s27, 1
      %p150 = por %p148, %p149
      %p151 = scmp.ne.s32.totalorder %s142, %s143
      %p152 = scmp.eq.s32.totalorder %s27, 0
      %p153 = por %p151, %p152
      %p154 = scmp.ne.s32.totalorder %s142, %s143
      %p155 = scmp.eq.s32.totalorder %s28, 1
      %p156 = por %p154, %p155
      %p158 = scmp.ne.s32.totalorder %s143, %s157
      %p159 = scmp.eq.s32.totalorder %s28, 0
      %p160 = por %p158, %p159
      %s162 = sadd.s32 %s161, 1
      %p165 = scmp.eq.s32.totalorder %s22, 1
      %p166 = scmp.ne.s32.totalorder %s161, %s163
      %p167 = scmp.eq.s32.totalorder %s22, 0
      %p168 = por %p166, %p167
      %p169 = scmp.ne.s32.totalorder %s161, %s163
      %p170 = scmp.eq.s32.totalorder %s27, 1
      %p171 = por %p169, %p170
      %p172 = scmp.ne.s32.totalorder %s163, %s164
      %p173 = scmp.eq.s32.totalorder %s27, 0
      %p174 = por %p172, %p173
      %p175 = scmp.ne.s32.totalorder %s163, %s164
      %p176 = scmp.eq.s32.totalorder %s28, 1
      %p177 = por %p175, %p176
      %p179 = scmp.ne.s32.totalorder %s164, %s178
      %p180 = scmp.eq.s32.totalorder %s28, 0
      %p181 = por %p179, %p180
      %s183 = sadd.s32 %s182, 1
      %p186 = scmp.eq.s32.totalorder %s22, 1
      %p187 = scmp.ne.s32.totalorder %s182, %s184
      %p188 = scmp.eq.s32.totalorder %s22, 0
      %p189 = por %p187, %p188
      %p190 = scmp.ne.s32.totalorder %s182, %s184
      %p191 = scmp.eq.s32.totalorder %s27, 1
      %p192 = por %p190, %p191
      %p193 = scmp.ne.s32.totalorder %s184, %s185
      %p194 = scmp.eq.s32.totalorder %s27, 0
      %p195 = por %p193, %p194
      %p196 = scmp.ne.s32.totalorder %s184, %s185
      %p197 = scmp.eq.s32.totalorder %s28, 1
      %p198 = por %p196, %p197
      %p200 = scmp.ne.s32.totalorder %s185, %s199
      %p201 = scmp.eq.s32.totalorder %s28, 0
      %p202 = por %p200, %p201
      %s204 = sadd.s32 %s203, 1
      %p207 = scmp.eq.s32.totalorder %s22, 1
      %p208 = scmp.ne.s32.totalorder %s203, %s205
      %p209 = scmp.eq.s32.totalorder %s22, 0
      %p210 = por %p208, %p209
      %p211 = scmp.ne.s32.totalorder %s203, %s205
      %p212 = scmp.eq.s32.totalorder %s27, 1
      %p213 = por %p211, %p212
      %p214 = scmp.ne.s32.totalorder %s205, %s206
      %p215 = scmp.eq.s32.totalorder %s27, 0
      %p216 = por %p214, %p215
      %p217 = scmp.ne.s32.totalorder %s205, %s206
      %p218 = scmp.eq.s32.totalorder %s28, 1
      %p219 = por %p217, %p218
      %p221 = scmp.ne.s32.totalorder %s206, %s220
      %p222 = scmp.eq.s32.totalorder %s28, 0
      %p223 = por %p221, %p222
      %s225 = sadd.s32 %s224, 1
      %p228 = scmp.eq.s32.totalorder %s22, 1
      %p229 = scmp.ne.s32.totalorder %s224, %s226
      %p230 = scmp.eq.s32.totalorder %s22, 0
      %p231 = por %p229, %p230
      %p232 = scmp.ne.s32.totalorder %s224, %s226
      %p233 = scmp.eq.s32.totalorder %s27, 1
      %p234 = por %p232, %p233
      %p235 = scmp.ne.s32.totalorder %s226, %s227
      %p236 = scmp.eq.s32.totalorder %s27, 0
      %p237 = por %p235, %p236
      %p238 = scmp.ne.s32.totalorder %s226, %s227
      %p239 = scmp.eq.s32.totalorder %s28, 1
      %p240 = por %p238, %p239
      %p242 = scmp.ne.s32.totalorder %s227, %s241
      %p243 = scmp.eq.s32.totalorder %s28, 0
      %p244 = por %p242, %p243
      %s246 = sadd.s32 %s245, 1
      %p249 = scmp.eq.s32.totalorder %s22, 1
      %p250 = scmp.ne.s32.totalorder %s245, %s247
      %p251 = scmp.eq.s32.totalorder %s22, 0
      %p252 = por %p250, %p251
      %p253 = scmp.ne.s32.totalorder %s245, %s247
      %p254 = scmp.eq.s32.totalorder %s27, 1
      %p255 = por %p253, %p254
      %p256 = scmp.ne.s32.totalorder %s247, %s248
      %p257 = scmp.eq.s32.totalorder %s27, 0
      %p258 = por %p256, %p257
      %p259 = scmp.ne.s32.totalorder %s247, %s248
      %p260 = scmp.eq.s32.totalorder %s28, 1
      %p261 = por %p259, %p260
      %p263 = scmp.ne.s32.totalorder %s248, %s262
      %p264 = scmp.eq.s32.totalorder %s28, 0
      %p265 = por %p263, %p264
      %s267 = sadd.s32 %s266, 1
      %p270 = scmp.eq.s32.totalorder %s22, 1
      %p271 = scmp.ne.s32.totalorder %s266, %s268
      %p272 = scmp.eq.s32.totalorder %s22, 0
      %p273 = por %p271, %p272
      %p274 = scmp.ne.s32.totalorder %s266, %s268
      %p275 = scmp.eq.s32.totalorder %s27, 1
      %p276 = por %p274, %p275
      %p277 = scmp.ne.s32.totalorder %s268, %s269
      %p278 = scmp.eq.s32.totalorder %s27, 0
      %p279 = por %p277, %p278
      %p280 = scmp.ne.s32.totalorder %s268, %s269
      %p281 = scmp.eq.s32.totalorder %s28, 1
      %p282 = por %p280, %p281
      %p284 = scmp.ne.s32.totalorder %s269, %s283
      %p285 = scmp.eq.s32.totalorder %s28, 0
      %p286 = por %p284, %p285
      %s288 = sadd.s32 %s287, 1
      %p291 = scmp.eq.s32.totalorder %s22, 1
      %p292 = scmp.ne.s32.totalorder %s287, %s289
      %p293 = scmp.eq.s32.totalorder %s22, 0
      %p294 = por %p292, %p293
      %p295 = scmp.ne.s32.totalorder %s287, %s289
      %p296 = scmp.eq.s32.totalorder %s27, 1
      %p297 = por %p295, %p296
      %p298 = scmp.ne.s32.totalorder %s289, %s290
      %p299 = scmp.eq.s32.totalorder %s27, 0
      %p300 = por %p298, %p299
      %p301 = scmp.ne.s32.totalorder %s289, %s290
      %p302 = scmp.eq.s32.totalorder %s28, 1
      %p303 = por %p301, %p302
      %p305 = scmp.ne.s32.totalorder %s290, %s304
      %p306 = scmp.eq.s32.totalorder %s28, 0
      %p307 = por %p305, %p306
      %s308 = ssub.s32 %s22, %s29
      %p309 = scmp.eq.s32.totalorder %s308, 0
      %s311 = sadd.s32 %s310, 1
      %s312 = scalar_select %p309, %s310, %s311
      %p315 = pneg %p309
      %p316 = scmp.eq.s32.totalorder %s22, 1
      %p317 = por %p315, %p316
      %p318 = scmp.ne.s32.totalorder %s310, %s313
      %p319 = scmp.eq.s32.totalorder %s22, 0
      %p320 = por %p318, %p319
      %p321 = scmp.ne.s32.totalorder %s310, %s313
      %p322 = scmp.eq.s32.totalorder %s27, 1
      %p323 = por %p321, %p322
      %p324 = scmp.ne.s32.totalorder %s313, %s314
      %p325 = scmp.eq.s32.totalorder %s27, 0
      %p326 = por %p324, %p325
      %p327 = scmp.ne.s32.totalorder %s313, %s314
      %p328 = scmp.eq.s32.totalorder %s28, 1
      %p329 = por %p327, %p328
      %p331 = scmp.ne.s32.totalorder %s314, %s330
      %p332 = scmp.eq.s32.totalorder %s28, 0
      %p333 = por %p331, %p332
      %p334 = scmp.le.s32.totalorder 1, %s22
      %p335 = scmp.lt.s32.totalorder %s22, 3
      %p336 = pnand %p334, %p335
      %p337 = pneg %p336
      // Predicated region
      $region9: #{tpu_custom_call.1} parent=5 // pred_check
        _
      $region10: #{tpu_custom_call.1} parent=5 // pred_check_branch
        %339 = sbr.rel (%p336) target = $region12
      $region11: #{tpu_custom_call.1} parent=5 // pred_region
        %s340 = ssub.s32 %s22, 1
        // Predicated region
        $region13: #{tpu_custom_call.1} parent=11 // pred_check
          %p341 = pneg %p69
        $region14: #{tpu_custom_call.1} parent=11 // pred_check_branch
          %343 = sbr.rel (%p341) target = $region16
        $region15: #{tpu_custom_call.1} parent=11 // pred_region
          _
        $region16: #{tpu_custom_call.1} parent=11 // pred_fallthru
          _
        // Predicated region
        $region17: #{tpu_custom_call.1} parent=11 // pred_check
          %p344 = pneg %p90
        $region18: #{tpu_custom_call.1} parent=11 // pred_check_branch
          %346 = sbr.rel (%p344) target = $region20
        $region19: #{tpu_custom_call.1} parent=11 // pred_region
          _
        $region20: #{tpu_custom_call.1} parent=11 // pred_fallthru
          _
        // Predicated region
        $region21: #{tpu_custom_call.1} parent=11 // pred_check
          %p347 = pneg %p111
        $region22: #{tpu_custom_call.1} parent=11 // pred_check_branch
          %349 = sbr.rel (%p347) target = $region24
        $region23: #{tpu_custom_call.1} parent=11 // pred_region
          _
        $region24: #{tpu_custom_call.1} parent=11 // pred_fallthru
          _
        // Predicated region
        $region25: #{tpu_custom_call.1} parent=11 // pred_check
          %p350 = pneg %p132
        $region26: #{tpu_custom_call.1} parent=11 // pred_check_branch
          %352 = sbr.rel (%p350) target = $region28
        $region27: #{tpu_custom_call.1} parent=11 // pred_region
          _
        $region28: #{tpu_custom_call.1} parent=11 // pred_fallthru
          _
        // Predicated region
        $region29: #{tpu_custom_call.1} parent=11 // pred_check
          %p353 = pneg %p153
        $region30: #{tpu_custom_call.1} parent=11 // pred_check_branch
          %355 = sbr.rel (%p353) target = $region32
        $region31: #{tpu_custom_call.1} parent=11 // pred_region
          _
        $region32: #{tpu_custom_call.1} parent=11 // pred_fallthru
          _
        // Predicated region
        $region33: #{tpu_custom_call.1} parent=11 // pred_check
          %p356 = pneg %p174
        $region34: #{tpu_custom_call.1} parent=11 // pred_check_branch
          %358 = sbr.rel (%p356) target = $region36
        $region35: #{tpu_custom_call.1} parent=11 // pred_region
          _
        $region36: #{tpu_custom_call.1} parent=11 // pred_fallthru
          _
        // Predicated region
        $region37: #{tpu_custom_call.1} parent=11 // pred_check
          %p359 = pneg %p195
        $region38: #{tpu_custom_call.1} parent=11 // pred_check_branch
          %361 = sbr.rel (%p359) target = $region40
        $region39: #{tpu_custom_call.1} parent=11 // pred_region
          _
        $region40: #{tpu_custom_call.1} parent=11 // pred_fallthru
          _
        // Predicated region
        $region41: #{tpu_custom_call.1} parent=11 // pred_check
          %p362 = pneg %p216
        $region42: #{tpu_custom_call.1} parent=11 // pred_check_branch
          %364 = sbr.rel (%p362) target = $region44
        $region43: #{tpu_custom_call.1} parent=11 // pred_region
          _
        $region44: #{tpu_custom_call.1} parent=11 // pred_fallthru
          _
        // Predicated region
        $region45: #{tpu_custom_call.1} parent=11 // pred_check
          %p365 = pneg %p237
        $region46: #{tpu_custom_call.1} parent=11 // pred_check_branch
          %367 = sbr.rel (%p365) target = $region48
        $region47: #{tpu_custom_call.1} parent=11 // pred_region
          _
        $region48: #{tpu_custom_call.1} parent=11 // pred_fallthru
          _
        // Predicated region
        $region49: #{tpu_custom_call.1} parent=11 // pred_check
          %p368 = pneg %p258
        $region50: #{tpu_custom_call.1} parent=11 // pred_check_branch
          %370 = sbr.rel (%p368) target = $region52
        $region51: #{tpu_custom_call.1} parent=11 // pred_region
          _
        $region52: #{tpu_custom_call.1} parent=11 // pred_fallthru
          _
        // Predicated region
        $region53: #{tpu_custom_call.1} parent=11 // pred_check
          %p371 = pneg %p279
        $region54: #{tpu_custom_call.1} parent=11 // pred_check_branch
          %373 = sbr.rel (%p371) target = $region56
        $region55: #{tpu_custom_call.1} parent=11 // pred_region
          _
        $region56: #{tpu_custom_call.1} parent=11 // pred_fallthru
          _
        // Predicated region
        $region57: #{tpu_custom_call.1} parent=11 // pred_check
          %p374 = pneg %p300
        $region58: #{tpu_custom_call.1} parent=11 // pred_check_branch
          %376 = sbr.rel (%p374) target = $region60
        $region59: #{tpu_custom_call.1} parent=11 // pred_region
          _
        $region60: #{tpu_custom_call.1} parent=11 // pred_fallthru
          _
      $region12: #{tpu_custom_call.1} parent=5 // pred_fallthru
        _
      %p377 = scmp.lt.s32.totalorder %s22, 2
      // Predicated region
      $region61: #{tpu_custom_call.1} parent=5 // pred_check
        %p378 = pneg %p377
      $region62: #{tpu_custom_call.1} parent=5 // pred_check_branch
        %380 = sbr.rel (%p378) target = $region64
      $region63: #{tpu_custom_call.1} parent=5 // pred_region
        // Predicated region
        $region65: #{tpu_custom_call.1} parent=63 // pred_check
          %p381 = pneg %p42
        $region66: #{tpu_custom_call.1} parent=63 // pred_check_branch
          %383 = sbr.rel (%p381) target = $region68
        $region67: #{tpu_custom_call.1} parent=63 // pred_region
          %p384 = scmp.lt.s32.totalorder %s22, 1
          %s385 = scalar_select %p384, %s22, 1
          %s386 = smul.addr %s385, 8
          %s387 = scalar_lea.vmem %s0, %s386
        $region68: #{tpu_custom_call.1} parent=63 // pred_fallthru
          _
      $region64: #{tpu_custom_call.1} parent=5 // pred_fallthru
        _
      %p388 = scmp.le.s32.totalorder 1, %s22
      %p389 = scmp.lt.s32.totalorder %s22, 3
      %p390 = pnand %p388, %p389
      %p391 = pneg %p390
      // Predicated region
      $region69: #{tpu_custom_call.1} parent=5 // pred_check
        _
      $region70: #{tpu_custom_call.1} parent=5 // pred_check_branch
        %393 = sbr.rel (%p390) target = $region72
      $region71: #{tpu_custom_call.1} parent=5 // pred_region
        %s394 = ssub.s32 %s22, 1
        %p395 = scmp.lt.s32.totalorder %s27, 1
        %s396 = scalar_select %p395, %s27, 1
        %s397 = smul.addr %s396, 8
        %s398 = scalar_lea.vmem %s0, %s397
        %p399 = pneg %p48
        %p400 = pneg %p45
        %p401 = pneg %p69
        %p402 = pneg %p66
        %p403 = pneg %p90
        %p404 = pneg %p87
        %p405 = pneg %p111
        %p406 = pneg %p108
        %p407 = pneg %p132
        %p408 = pneg %p129
        %p409 = pneg %p153
        %p410 = pneg %p150
        %p411 = pneg %p174
        %p412 = pneg %p171
        %p413 = pneg %p195
        %p414 = pneg %p192
        %p415 = pneg %p216
        %p416 = pneg %p213
        %p417 = pneg %p237
        %p418 = pneg %p234
        %p419 = pneg %p258
        %p420 = pneg %p255
        %p421 = pneg %p279
        %p422 = pneg %p276
        %p423 = pneg %p300
        %p424 = pneg %p297
        %p425 = pneg %p326
        %p426 = pneg %p323
        %s427 = sand.u32 %s313, 1
        %s428 = scalar_lea.sflag [#allocation3], %s427
        %s429 = sand.u32 %s313, 1
        %s430 = smul.addr %s429, 8
        %s431 = scalar_lea.vmem [#allocation2], %s430
        %p432 = scmp.lt.s32.totalorder %s27, 1
        %s433 = scalar_select %p432, %s27, 1
        %s434 = smul.addr %s433, 8
        %s435 = scalar_lea.vmem %s0, %s434
        %v437 = vld [vmem:[%s435] sm:$0xff]
        %v438 = vld [vmem:[%s1] sm:$0x1]
        %v439 = vld [vmem:[%s2] sm:$0x1]
        %vm440 = vcmask 261120
        %v441 = vsel %vm440, %v437, 0.0
        %442 = vadd.xlane.f32.xlu0 %v441
        %v443 = vpop.xlane.xlu0 %442
        %v444 = vrcp.pop 32.0
        %v445 = vmul.f32 32.0, %v444
        %v446 = vsub.f32 1.0, %v445
        %v447 = vmul.f32 %v444, %v446
        %v448 = vadd.f32 %v444, %v447
        %vm449 = vweird.f32 %v444
        %v450 = vsel %vm449, %v444, %v448
        %v451 = vmul.f32 %v443, %v450
        %v452 = vsub.f32 %v437, %v451
        %v453 = vmul.f32 %v452, %v452
        %v454 = vsel %vm440, %v453, 0.0
        %455 = vadd.xlane.f32.xlu0 %v454
        %v456 = vpop.xlane.xlu0 %455
        %v457 = vmul.f32 %v456, %v450
        %v458 = vadd.f32 %v457, 1e-06
        %v459 = vrsqrt.pop %v458
        %v460 = vmul.f32 %v459, %v458
        %v461 = vmul.f32 %v460, %v459
        %v462 = vmul.f32 0.5, %v461
        %v463 = vsub.f32 1.5, %v462
        %v464 = vmul.f32 %v459, %v463
        %vm465 = vweird.f32 %v458
        %vm466 = vweird.f32 %v459
        %vm467 = vmor %vm465, %vm466
        %v468 = vsel %vm467, %v459, %v464
        %v469 = vmul.f32 %v452, %v468
        %v471 = vperm.slane %v438, 0
        %v473 = vmul.f32 %v469, %v471
        %v475 = vperm.slane %v439, 0
        %v477 = vadd.f32 %v473, %v475
        %v478 = vpack.c.bf16 %v477, %v477
        %v479 = vld [vmem:[%s3] sm:$0xf]
        %v480 = vld [vmem:[%s3 + $0x4] sm:$0xf]
        %v481 = vld [vmem:[%s3 + $0x8] sm:$0xf]
        %v482 = vld [vmem:[%s3 + $0xc] sm:$0xf]
        %v483 = vld [vmem:[%s4] sm:$0x1]
        %v485 = vperm.slane %v483, 0
        %v491 = vunpack.c.l.b16 %v479
        %v492 = vunpack.c.l.b16 %v480
        %v493 = vunpack.c.l.b16 %v481
        %v494 = vunpack.c.l.b16 %v482
        %v495 = vpack.c.b16 %v492, %v491
        %v496 = vpack.c.b16 %v494, %v493
        %v500 = vsel %vm440, %v478, 0
        %502 = vmatpush.bf16.msra.mxu0 0
        %503 = vmatpush.bf16.msra.mxu0 0
        %504 = vmatpush.bf16.msra.mxu0 0
        %505 = vmatpush.bf16.msra.mxu0 0
        %506 = vmatpush.bf16.msra.mxu0 0
        %507 = vmatpush.bf16.msra.mxu0 0
        %508 = vmatpush.bf16.msra.mxu0 %v496
        %509 = vmatpush.bf16.msra.mxu0 %v495
        %510 = vmatmul.bf16.gmra.mxu0 %v500
        %v511 = vpop.f32.mrf.mxu0
        %v512 = vadd.f32 %v485, %v511
        %v513 = vpop.f32.mrf.mxu0
        %514 = vdwg.mxu0
        %516 = vrot.lane.b32.xlu0 %v512, 120
        %v517 = vpop.permute.xlu0 %516
        %519 = vrot.lane.b32.xlu0 %v512, 112
        %v520 = vpop.permute.xlu0 %519
        %522 = vrot.lane.b32.xlu0 %v512, 104
        %v523 = vpop.permute.xlu0 %522
        %v525 = vpack.c.bf16 %v512, %v512
        %v526 = vpack.c.bf16 %v517, %v517
        %v527 = vpack.c.bf16 %v520, %v520
        %v528 = vpack.c.bf16 %v523, %v523
        %v530 = vunpack.c.l.b16 %v525
        %v531 = vpack.c.b16 %v530, %v530
        %532 = vrot.lane.b32.xlu0 %v531, 96
        %v533 = vpop.permute.xlu0 %532
        %vm534 = vcmask 64512
        %v536 = vsel %vm534, %v525, 0
        %v539 = vsel %vm534, %v533, 0
        %541 = vmatpush.bf16.xpose.msra.mxu0 0
        %542 = vmatpush.bf16.xpose.msra.mxu0 0
        %543 = vmatpush.bf16.xpose.msra.mxu0 0
        %544 = vmatpush.bf16.xpose.msra.mxu0 0
        %545 = vmatpush.bf16.xpose.msra.mxu0 0
        %546 = vmatpush.bf16.xpose.msra.mxu0 0
        %547 = vmatpush.bf16.xpose.msra.mxu0 0
        %548 = vmatpush.bf16.xpose.msra.mxu0 %v539
        %549 = vmatmul.bf16.gmra.mxu0 %v536
        %v550 = vpop.f32.mrf.mxu0
        %v551 = vadd.f32 0.0, %v550
        %v552 = vpop.f32.mrf.mxu0
        %553 = vdwg.mxu0
        %v555 = vunpack.c.l.b16 %v526
        %v556 = vpack.c.b16 %v555, %v555
        %557 = vrot.lane.b32.xlu0 %v556, 96
        %v558 = vpop.permute.xlu0 %557
        %v560 = vsel %vm534, %v526, 0
        %v563 = vsel %vm534, %v558, 0
        %565 = vmatpush.bf16.xpose.msra.mxu0 0
        %566 = vmatpush.bf16.xpose.msra.mxu0 0
        %567 = vmatpush.bf16.xpose.msra.mxu0 0
        %568 = vmatpush.bf16.xpose.msra.mxu0 0
        %569 = vmatpush.bf16.xpose.msra.mxu0 0
        %570 = vmatpush.bf16.xpose.msra.mxu0 0
        %571 = vmatpush.bf16.xpose.msra.mxu0 0
        %572 = vmatpush.bf16.xpose.msra.mxu0 %v563
        %573 = vmatmul.bf16.gmra.mxu0 %v560
        %v574 = vpop.f32.mrf.mxu0
        %v575 = vadd.f32 0.0, %v574
        %v576 = vpop.f32.mrf.mxu0
        %577 = vdwg.mxu0
        %v579 = vunpack.c.l.b16 %v527
        %v580 = vpack.c.b16 %v579, %v579
        %581 = vrot.lane.b32.xlu0 %v580, 96
        %v582 = vpop.permute.xlu0 %581
        %v584 = vsel %vm534, %v527, 0
        %v587 = vsel %vm534, %v582, 0
        %589 = vmatpush.bf16.xpose.msra.mxu0 0
        %590 = vmatpush.bf16.xpose.msra.mxu0 0
        %591 = vmatpush.bf16.xpose.msra.mxu0 0
        %592 = vmatpush.bf16.xpose.msra.mxu0 0
        %593 = vmatpush.bf16.xpose.msra.mxu0 0
        %594 = vmatpush.bf16.xpose.msra.mxu0 0
        %595 = vmatpush.bf16.xpose.msra.mxu0 0
        %596 = vmatpush.bf16.xpose.msra.mxu0 %v587
        %597 = vmatmul.bf16.gmra.mxu0 %v584
        %v598 = vpop.f32.mrf.mxu0
        %v599 = vadd.f32 0.0, %v598
        %v600 = vpop.f32.mrf.mxu0
        %601 = vdwg.mxu0
        %v603 = vunpack.c.l.b16 %v528
        %v604 = vpack.c.b16 %v603, %v603
        %605 = vrot.lane.b32.xlu0 %v604, 96
        %v606 = vpop.permute.xlu0 %605
        %v608 = vsel %vm534, %v528, 0
        %v611 = vsel %vm534, %v606, 0
        %613 = vmatpush.bf16.xpose.msra.mxu0 0
        %614 = vmatpush.bf16.xpose.msra.mxu0 0
        %615 = vmatpush.bf16.xpose.msra.mxu0 0
        %616 = vmatpush.bf16.xpose.msra.mxu0 0
        %617 = vmatpush.bf16.xpose.msra.mxu0 0
        %618 = vmatpush.bf16.xpose.msra.mxu0 0
        %619 = vmatpush.bf16.xpose.msra.mxu0 0
        %620 = vmatpush.bf16.xpose.msra.mxu0 %v611
        %621 = vmatmul.bf16.gmra.mxu0 %v608
        %v622 = vpop.f32.mrf.mxu0
        %v623 = vadd.f32 0.0, %v622
        %v624 = vpop.f32.mrf.mxu0
        %625 = vdwg.mxu0
        %v626 = vsel %vm534, %v551, -inf
        %627 = vmax.xlane.f32.xlu0 %v626
        %v628 = vpop.xlane.xlu0 %627
        %v629 = vsel %vm534, %v575, -inf
        %630 = vmax.xlane.f32.xlu0 %v629
        %v631 = vpop.xlane.xlu0 %630
        %v632 = vsel %vm534, %v599, -inf
        %633 = vmax.xlane.f32.xlu0 %v632
        %v634 = vpop.xlane.xlu0 %633
        %v635 = vsel %vm534, %v623, -inf
        %636 = vmax.xlane.f32.xlu0 %v635
        %v637 = vpop.xlane.xlu0 %636
        %v638 = vsub.f32 %v551, %v628
        %v639 = vsub.f32 %v575, %v631
        %v640 = vsub.f32 %v599, %v634
        %v641 = vsub.f32 %v623, %v637
        %v642 = vmul.f32 %v638, 1.442695
        %v643 = vpow.pop %v642
        %v644 = vmul.f32 %v639, 1.442695
        %v645 = vpow.pop %v644
        %v646 = vmul.f32 %v640, 1.442695
        %v647 = vpow.pop %v646
        %v648 = vmul.f32 %v641, 1.442695
        %v649 = vpow.pop %v648
        %v650 = vsel %vm534, %v643, 0.0
        %651 = vadd.xlane.f32.xlu0 %v650
        %v652 = vpop.xlane.xlu0 %651
        %v653 = vsel %vm534, %v645, 0.0
        %654 = vadd.xlane.f32.xlu0 %v653
        %v655 = vpop.xlane.xlu0 %654
        %v656 = vsel %vm534, %v647, 0.0
        %657 = vadd.xlane.f32.xlu0 %v656
        %v658 = vpop.xlane.xlu0 %657
        %v659 = vsel %vm534, %v649, 0.0
        %660 = vadd.xlane.f32.xlu0 %v659
        %v661 = vpop.xlane.xlu0 %660
        %v662 = vrcp.pop %v652
        %v663 = vrcp.pop %v655
        %v664 = vrcp.pop %v658
        %v665 = vrcp.pop %v661
        %v666 = vmul.f32 %v643, %v662
        %v667 = vmul.f32 %v645, %v663
        %v668 = vmul.f32 %v647, %v664
        %v669 = vmul.f32 %v649, %v665
        %v670 = vpack.c.bf16 %v666, %v666
        %v671 = vpack.c.bf16 %v667, %v667
        %v672 = vpack.c.bf16 %v668, %v668
        %v673 = vpack.c.bf16 %v669, %v669
        %674 = vrot.lane.b32.xlu0 %v531, 64
        %v675 = vpop.permute.xlu0 %674
        %v677 = vsel %vm534, %v670, 0
        %vm679 = vcmask 1043456
        %v681 = vsel %vm679, %v675, 0
        %683 = vmatpush.bf16.msra.mxu0 0
        %684 = vmatpush.bf16.msra.mxu0 0
        %685 = vmatpush.bf16.msra.mxu0 0
        %686 = vmatpush.bf16.msra.mxu0 0
        %687 = vmatpush.bf16.msra.mxu0 0
        %688 = vmatpush.bf16.msra.mxu0 0
        %689 = vmatpush.bf16.msra.mxu0 0
        %690 = vmatpush.bf16.msra.mxu0 %v681
        %691 = vmatmul.bf16.gmra.mxu0 %v677
        %v692 = vpop.f32.mrf.mxu0
        %v693 = vadd.f32 0.0, %v692
        %v694 = vpop.f32.mrf.mxu0
        %695 = vdwg.mxu0
        %696 = vrot.lane.b32.xlu0 %v556, 64
        %v697 = vpop.permute.xlu0 %696
        %v699 = vsel %vm534, %v671, 0
        %v702 = vsel %vm679, %v697, 0
        %704 = vmatpush.bf16.msra.mxu0 0
        %705 = vmatpush.bf16.msra.mxu0 0
        %706 = vmatpush.bf16.msra.mxu0 0
        %707 = vmatpush.bf16.msra.mxu0 0
        %708 = vmatpush.bf16.msra.mxu0 0
        %709 = vmatpush.bf16.msra.mxu0 0
        %710 = vmatpush.bf16.msra.mxu0 0
        %711 = vmatpush.bf16.msra.mxu0 %v702
        %712 = vmatmul.bf16.gmra.mxu0 %v699
        %v713 = vpop.f32.mrf.mxu0
        %v714 = vadd.f32 0.0, %v713
        %v715 = vpop.f32.mrf.mxu0
        %716 = vdwg.mxu0
        %717 = vrot.lane.b32.xlu0 %v580, 64
        %v718 = vpop.permute.xlu0 %717
        %v720 = vsel %vm534, %v672, 0
        %v723 = vsel %vm679, %v718, 0
        %725 = vmatpush.bf16.msra.mxu0 0
        %726 = vmatpush.bf16.msra.mxu0 0
        %727 = vmatpush.bf16.msra.mxu0 0
        %728 = vmatpush.bf16.msra.mxu0 0
        %729 = vmatpush.bf16.msra.mxu0 0
        %730 = vmatpush.bf16.msra.mxu0 0
        %731 = vmatpush.bf16.msra.mxu0 0
        %732 = vmatpush.bf16.msra.mxu0 %v723
        %733 = vmatmul.bf16.gmra.mxu0 %v720
        %v734 = vpop.f32.mrf.mxu0
        %v735 = vadd.f32 0.0, %v734
        %v736 = vpop.f32.mrf.mxu0
        %737 = vdwg.mxu0
        %738 = vrot.lane.b32.xlu0 %v604, 64
        %v739 = vpop.permute.xlu0 %738
        %v741 = vsel %vm534, %v673, 0
        %v744 = vsel %vm679, %v739, 0
        %746 = vmatpush.bf16.msra.mxu0 0
        %747 = vmatpush.bf16.msra.mxu0 0
        %748 = vmatpush.bf16.msra.mxu0 0
        %749 = vmatpush.bf16.msra.mxu0 0
        %750 = vmatpush.bf16.msra.mxu0 0
        %751 = vmatpush.bf16.msra.mxu0 0
        %752 = vmatpush.bf16.msra.mxu0 0
        %753 = vmatpush.bf16.msra.mxu0 %v744
        %754 = vmatmul.bf16.gmra.mxu0 %v741
        %v755 = vpop.f32.mrf.mxu0
        %v756 = vadd.f32 0.0, %v755
        %v757 = vpop.f32.mrf.mxu0
        %758 = vdwg.mxu0
        %v759 = vpack.c.bf16 %v693, %v693
        %v760 = vpack.c.bf16 %v714, %v714
        %v761 = vpack.c.bf16 %v735, %v735
        %v762 = vpack.c.bf16 %v756, %v756
        %v763 = vld [vmem:[%s5] sm:$0xf]
        %v764 = vld [vmem:[%s5 + $0x4] sm:$0xf]
        %v766 = vsel %vm534, %v760, 0
        %v769 = vsel %vm679, %v764, 0
        %771 = vmatpush.bf16.msra.mxu0 0
        %772 = vmatpush.bf16.msra.mxu0 0
        %773 = vmatpush.bf16.msra.mxu0 0
        %774 = vmatpush.bf16.msra.mxu0 0
        %775 = vmatpush.bf16.msra.mxu0 0
        %776 = vmatpush.bf16.msra.mxu0 0
        %777 = vmatpush.bf16.msra.mxu0 0
        %778 = vmatpush.bf16.msra.mxu0 %v769
        %779 = vmatmul.bf16.gmra.mxu0 %v766
        %v780 = vpop.f32.mrf.mxu0
        %v781 = vadd.f32 0.0, %v780
        %v782 = vpop.f32.mrf.mxu0
        %783 = vdwg.mxu0
        %v785 = vsel %vm534, %v759, 0
        %v788 = vsel %vm679, %v763, 0
        %790 = vmatpush.bf16.msra.mxu0 0
        %791 = vmatpush.bf16.msra.mxu0 0
        %792 = vmatpush.bf16.msra.mxu0 0
        %793 = vmatpush.bf16.msra.mxu0 0
        %794 = vmatpush.bf16.msra.mxu0 0
        %795 = vmatpush.bf16.msra.mxu0 0
        %796 = vmatpush.bf16.msra.mxu0 0
        %797 = vmatpush.bf16.msra.mxu0 %v788
        %798 = vmatmul.bf16.gmra.mxu0 %v785
        %v799 = vpop.f32.mrf.mxu0
        %v800 = vadd.f32 %v781, %v799
        %v801 = vpop.f32.mrf.mxu0
        %802 = vdwg.mxu0
        %v803 = vld [vmem:[%s5 + $0x8] sm:$0xf]
        %v805 = vsel %vm534, %v761, 0
        %v808 = vsel %vm679, %v803, 0
        %810 = vmatpush.bf16.msra.mxu0 0
        %811 = vmatpush.bf16.msra.mxu0 0
        %812 = vmatpush.bf16.msra.mxu0 0
        %813 = vmatpush.bf16.msra.mxu0 0
        %814 = vmatpush.bf16.msra.mxu0 0
        %815 = vmatpush.bf16.msra.mxu0 0
        %816 = vmatpush.bf16.msra.mxu0 0
        %817 = vmatpush.bf16.msra.mxu0 %v808
        %818 = vmatmul.bf16.gmra.mxu0 %v805
        %v819 = vpop.f32.mrf.mxu0
        %v820 = vadd.f32 0.0, %v819
        %v821 = vpop.f32.mrf.mxu0
        %822 = vdwg.mxu0
        %v823 = vadd.f32 %v800, %v820
        %v824 = vld [vmem:[%s5 + $0xc] sm:$0xf]
        %v826 = vsel %vm534, %v762, 0
        %v829 = vsel %vm679, %v824, 0
        %831 = vmatpush.bf16.msra.mxu0 0
        %832 = vmatpush.bf16.msra.mxu0 0
        %833 = vmatpush.bf16.msra.mxu0 0
        %834 = vmatpush.bf16.msra.mxu0 0
        %835 = vmatpush.bf16.msra.mxu0 0
        %836 = vmatpush.bf16.msra.mxu0 0
        %837 = vmatpush.bf16.msra.mxu0 0
        %838 = vmatpush.bf16.msra.mxu0 %v829
        %839 = vmatmul.bf16.gmra.mxu0 %v826
        %v840 = vpop.f32.mrf.mxu0
        %v841 = vadd.f32 0.0, %v840
        %v842 = vpop.f32.mrf.mxu0
        %843 = vdwg.mxu0
        %v844 = vadd.f32 %v823, %v841
        %v845 = vld [vmem:[%s6] sm:$0x1]
        %v847 = vperm.slane %v845, 0
        %v849 = vadd.f32 %v844, %v847
        %v850 = vadd.f32 %v437, %v849
        %v851 = vld [vmem:[%s7] sm:$0x1]
        %v852 = vld [vmem:[%s8] sm:$0x1]
        %v853 = vsel %vm440, %v850, 0.0
        %854 = vadd.xlane.f32.xlu0 %v853
        %v855 = vpop.xlane.xlu0 %854
        %v856 = vmul.f32 %v855, %v450
        %v857 = vsub.f32 %v850, %v856
        %v858 = vmul.f32 %v857, %v857
        %v859 = vsel %vm440, %v858, 0.0
        %860 = vadd.xlane.f32.xlu0 %v859
        %v861 = vpop.xlane.xlu0 %860
        %v862 = vmul.f32 %v861, %v450
        %v863 = vadd.f32 %v862, 1e-06
        %v864 = vrsqrt.pop %v863
        %v865 = vmul.f32 %v864, %v863
        %v866 = vmul.f32 %v865, %v864
        %v867 = vmul.f32 0.5, %v866
        %v868 = vsub.f32 1.5, %v867
        %v869 = vmul.f32 %v864, %v868
        %vm870 = vweird.f32 %v863
        %vm871 = vweird.f32 %v864
        %vm872 = vmor %vm870, %vm871
        %v873 = vsel %vm872, %v864, %v869
        %v874 = vmul.f32 %v857, %v873
        %v876 = vperm.slane %v851, 0
        %v878 = vmul.f32 %v874, %v876
        %v880 = vperm.slane %v852, 0
        %v882 = vadd.f32 %v878, %v880
        %v883 = vpack.c.bf16 %v882, %v882
        %v884 = vld [vmem:[%s9] sm:$0xf]
        %v885 = vld [vmem:[%s9 + $0x4] sm:$0xf]
        %v886 = vld [vmem:[%s9 + $0x8] sm:$0xf]
        %v887 = vld [vmem:[%s9 + $0xc] sm:$0xf]
        %v888 = vld [vmem:[%s10] sm:$0x1]
        %v890 = vperm.slane %v888, 0
        %v896 = vunpack.c.l.b16 %v884
        %v897 = vunpack.c.l.b16 %v885
        %v898 = vunpack.c.l.b16 %v886
        %v899 = vunpack.c.l.b16 %v887
        %v900 = vpack.c.b16 %v897, %v896
        %v901 = vpack.c.b16 %v899, %v898
        %v905 = vsel %vm440, %v883, 0
        %907 = vmatpush.bf16.msra.mxu0 0
        %908 = vmatpush.bf16.msra.mxu0 0
        %909 = vmatpush.bf16.msra.mxu0 0
        %910 = vmatpush.bf16.msra.mxu0 0
        %911 = vmatpush.bf16.msra.mxu0 0
        %912 = vmatpush.bf16.msra.mxu0 0
        %913 = vmatpush.bf16.msra.mxu0 %v901
        %914 = vmatpush.bf16.msra.mxu0 %v900
        %915 = vmatmul.bf16.gmra.mxu0 %v905
        %v916 = vpop.f32.mrf.mxu0
        %v917 = vadd.f32 %v890, %v916
        %v918 = vpop.f32.mrf.mxu0
        %919 = vdwg.mxu0
        %v920 = vmul.f32 %v917, 0.5
        %v921 = vmul.f32 %v917, 0.70710677
        %v922 = vmul.f32 %v921, %v921
        %v923 = vmin.f32 16.0, %v922
        %v924 = vmul.f32 %v923, 2.1237322e-06
        %v925 = vadd.f32 %v924, 0.00028619796
        %v926 = vmul.f32 %v923, %v925
        %v927 = vadd.f32 %v926, 0.0036580483
        %v928 = vmul.f32 %v923, %v927
        %v929 = vadd.f32 %v928, 0.05243302
        %v930 = vmul.f32 %v923, %v929
        %v931 = vadd.f32 %v930, 0.18741608
        %v932 = vmul.f32 %v923, %v931
        %v933 = vadd.f32 %v932, 1.1283791
        %v934 = vmul.f32 %v921, %v933
        %v935 = vmul.f32 %v923, 3.8918573e-05
        %v936 = vadd.f32 %v935, 0.001143296
        %v937 = vmul.f32 %v923, %v936
        %v938 = vadd.f32 %v937, 0.014752088
        %v939 = vmul.f32 %v923, %v938
        %v940 = vadd.f32 %v939, 0.112945676
        %v941 = vmul.f32 %v923, %v940
        %v942 = vadd.f32 %v941, 0.4994258
        %v943 = vmul.f32 %v923, %v942
        %v944 = vadd.f32 %v943, 1.0
        %v945 = vrcp.pop %v944
        %v946 = vmul.f32 %v944, %v945
        %v947 = vsub.f32 1.0, %v946
        %v948 = vmul.f32 %v945, %v947
        %v949 = vadd.f32 %v945, %v948
        %vm950 = vweird.f32 %v944
        %vm951 = vweird.f32 %v945
        %vm952 = vmor %vm950, %vm951
        %v953 = vsel %vm952, %v945, %v949
        %v954 = vand.u32 2147483647, %v944
        %vm955 = vcmp.eq.f32.partialorder %v954, 8.507059e+37
        %v956 = vand.u32 %v944, 2147483648
        %v957 = vor.u32 1.1754944e-38, %v956
        %v958 = vsel %vm955, %v957, %v953
        %v959 = vmul.f32 %v934, %v958
        %v960 = vmin.f32 %v959, 1.0
        %v961 = vmax.f32 %v960, -1.0
        %v962 = vadd.f32 %v961, 1.0
        %v963 = vmul.f32 %v920, %v962
        %v964 = vpack.c.bf16 %v963, %v963
        %v965 = vld [vmem:[%s11] sm:$0xf]
        %v966 = vld [vmem:[%s11 + $0x4] sm:$0xf]
        %v967 = vld [vmem:[%s11 + $0x8] sm:$0xf]
        %v968 = vld [vmem:[%s11 + $0xc] sm:$0xf]
        %v969 = vld [vmem:[%s11 + $0x10] sm:$0xf]
        %v970 = vld [vmem:[%s11 + $0x14] sm:$0xf]
        %v971 = vld [vmem:[%s11 + $0x18] sm:$0xf]
        %v972 = vld [vmem:[%s11 + $0x1c] sm:$0xf]
        %v973 = vld [vmem:[%s11 + $0x20] sm:$0xf]
        %v974 = vld [vmem:[%s11 + $0x24] sm:$0xf]
        %v975 = vld [vmem:[%s11 + $0x28] sm:$0xf]
        %v976 = vld [vmem:[%s11 + $0x2c] sm:$0xf]
        %v977 = vld [vmem:[%s11 + $0x30] sm:$0xf]
        %v978 = vld [vmem:[%s11 + $0x34] sm:$0xf]
        %v979 = vld [vmem:[%s11 + $0x38] sm:$0xf]
        %v980 = vld [vmem:[%s11 + $0x3c] sm:$0xf]
        %v981 = vld [vmem:[%s12] sm:$0x1]
        %v983 = vperm.slane %v981, 0
        %v1001 = vunpack.c.l.b16 %v965
        %v1002 = vunpack.c.l.b16 %v966
        %v1003 = vunpack.c.l.b16 %v967
        %v1004 = vunpack.c.l.b16 %v968
        %v1005 = vunpack.c.l.b16 %v969
        %v1006 = vunpack.c.l.b16 %v970
        %v1007 = vunpack.c.l.b16 %v971
        %v1008 = vunpack.c.l.b16 %v972
        %v1009 = vunpack.c.l.b16 %v973
        %v1010 = vunpack.c.l.b16 %v974
        %v1011 = vunpack.c.l.b16 %v975
        %v1012 = vunpack.c.l.b16 %v976
        %v1013 = vunpack.c.l.b16 %v977
        %v1014 = vunpack.c.l.b16 %v978
        %v1015 = vunpack.c.l.b16 %v979
        %v1016 = vunpack.c.l.b16 %v980
        %v1017 = vpack.c.b16 %v1002, %v1001
        %v1018 = vpack.c.b16 %v1004, %v1003
        %v1019 = vpack.c.b16 %v1006, %v1005
        %v1020 = vpack.c.b16 %v1008, %v1007
        %v1021 = vpack.c.b16 %v1010, %v1009
        %v1022 = vpack.c.b16 %v1012, %v1011
        %v1023 = vpack.c.b16 %v1014, %v1013
        %v1024 = vpack.c.b16 %v1016, %v1015
        %1033 = vmatpush.bf16.msra.mxu0 %v1024
        %1034 = vmatpush.bf16.msra.mxu0 %v1023
        %1035 = vmatpush.bf16.msra.mxu0 %v1022
        %1036 = vmatpush.bf16.msra.mxu0 %v1021
        %1037 = vmatpush.bf16.msra.mxu0 %v1020
        %1038 = vmatpush.bf16.msra.mxu0 %v1019
        %1039 = vmatpush.bf16.msra.mxu0 %v1018
        %1040 = vmatpush.bf16.msra.mxu0 %v1017
        %1041 = vmatmul.bf16.gmra.mxu0 %v964
        %v1042 = vpop.f32.mrf.mxu0
        %v1043 = vadd.f32 %v983, %v1042
        %v1044 = vpop.f32.mrf.mxu0
        %1045 = vdwg.mxu0
        %v1046 = vadd.f32 %v850, %v1043
        %1047 = vst.msk [vmem:[%s431] sm:$0xff] %vm440, %v1046
        %s1048 = sand.u32 %s313, 1
        %s1049 = scalar_lea.sflag [#allocation3], %s1048
        %s1050 = sand.u32 %s313, 1
        %s1051 = smul.addr %s1050, 8
        %s1052 = scalar_lea.vmem [#allocation2], %s1051
        // Predicated region
        $region73: #{tpu_custom_call.1} parent=71 // pred_check
          %p1053 = pneg %p323
        $region74: #{tpu_custom_call.1} parent=71 // pred_check_branch
          %1055 = sbr.rel (%p1053) target = $region76
        $region75: #{tpu_custom_call.1} parent=71 // pred_region
          %1057 = vsyncadd %s1049, 0
          %s1058 = smul.addr %s27, 8
          %s1059 = scalar_lea.hbm %s13, %s1058
          %s1061 = sshll.u32 %s1052, 4
          %s1062 = int_to_ptr.vmem [resolvable:$true] %s1061
          %s1063 = sshll.u32 %s1059, 4
          %s1064 = int_to_ptr.hbm [resolvable:$true] %s1063
          %1066 = dma.vmem_to_hbm [thread:$0]  %s1062, 128, %s1064, %s1049
        $region76: #{tpu_custom_call.1} parent=71 // pred_fallthru
          _
      $region72: #{tpu_custom_call.1} parent=5 // pred_fallthru
        _
      %p1067 = scmp.le.s32.totalorder 2, %s22
      // Predicated region
      $region77: #{tpu_custom_call.1} parent=5 // pred_check
        %p1068 = pneg %p1067
      $region78: #{tpu_custom_call.1} parent=5 // pred_check_branch
        %1070 = sbr.rel (%p1068) target = $region80
      $region79: #{tpu_custom_call.1} parent=5 // pred_region
        %s1071 = ssub.s32 %s22, 2
        // Predicated region
        $region81: #{tpu_custom_call.1} parent=79 // pred_check
          %p1072 = pneg %p329
        $region82: #{tpu_custom_call.1} parent=79 // pred_check_branch
          %1074 = sbr.rel (%p1072) target = $region84
        $region83: #{tpu_custom_call.1} parent=79 // pred_region
          %s1075 = sand.u32 %s314, 1
          %s1076 = scalar_lea.sflag [#allocation3], %s1075
          %s1077 = sand.u32 %s314, 1
          %s1078 = smul.addr %s1077, 8
          %s1079 = scalar_lea.vmem [#allocation2], %s1078
          %1081 = dma.done %s1076, 128
        $region84: #{tpu_custom_call.1} parent=79 // pred_fallthru
          _
      $region80: #{tpu_custom_call.1} parent=5 // pred_fallthru
        _
    $region6: #{tpu_custom_call.1} parent=1 // loop_footer
      %s26 = sadd.s32 1, %s22
    $region7: #{tpu_custom_call.1} parent=1 // loop_footer_branch
      %21 = sbr.rel target = $region3
    $region8: #{tpu_custom_call.1} parent=1 // loop_exit
      _
    %1082 = vsyncpa [#allocation3], 1
    %s1083 = scalar_lea.sflag [#allocation3], 1
    %1084 = vsyncpa %s1083, 1

// kernel: tpu_custom_call.1
$region0: #{tpu_custom_call.1}
  #allocation0 [shape = 'u32[]', space=smem, size = 0x4, offset = 0x4, fixed_abs, tag = 'smem constant byte address 0x4 - core index']
  #allocation1 [shape = 'u32[72,128]{1,0:T(1,128)}', space=vmem, size = 0x9000, scoped, tag = 'internal scratch']
  %s0 = inlined_call_operand.vmem [shape: f32[16,32], index: 0, kind: input, shape index: {}]
  %s1 = inlined_call_operand.vmem [shape: f32[1,32], index: 1, kind: input, shape index: {}]
  %s2 = inlined_call_operand.vmem [shape: f32[1,32], index: 2, kind: input, shape index: {}]
  %s3 = inlined_call_operand.vmem [shape: bf16[32,96], index: 3, kind: input, shape index: {}]
  %s4 = inlined_call_operand.vmem [shape: f32[1,96], index: 4, kind: input, shape index: {}]
  %s5 = inlined_call_operand.vmem [shape: bf16[32,32], index: 5, kind: input, shape index: {}]
  %s6 = inlined_call_operand.vmem [shape: f32[1,32], index: 6, kind: input, shape index: {}]
  %s7 = inlined_call_operand.vmem [shape: f32[1,32], index: 7, kind: input, shape index: {}]
  %s8 = inlined_call_operand.vmem [shape: f32[1,32], index: 8, kind: input, shape index: {}]
  %s9 = inlined_call_operand.vmem [shape: bf16[32,128], index: 9, kind: input, shape index: {}]
  %s10 = inlined_call_operand.vmem [shape: f32[1,128], index: 10, kind: input, shape index: {}]
  %s11 = inlined_call_operand.vmem [shape: bf16[128,32], index: 11, kind: input, shape index: {}]
  %s12 = inlined_call_operand.vmem [shape: f32[1,32], index: 12, kind: input, shape index: {}]
  %s13 = inlined_call_operand.hbm [shape: f32[16,32], index: 13, kind: output, shape index: {}]
  %s14 = sld [smem:[#allocation0]]
  $region85: #{tpu_custom_call.1} parent=0
    _
  %s16 = ssub.s32 1, %s14
  %s17 = scalar_select 0, %s16, %s14
  $region1: #{tpu_custom_call.1} parent=0
    #allocation2 [shape = 'u8[8192]{0}', space=vmem, size = 0x2000, scoped, tag = 'output window, operand 0']
    #allocation3 [shape = 's32[2]{0}', space=sflag, size = 0x8, scoped, tag = 'scoped memory for tpu_custom_call.1']
    %18 = vsyncpa [#allocation3], 0
    %s19 = scalar_lea.sflag [#allocation3], 1
    %20 = vsyncpa %s19, 0
    loop: start=0, step=1, limit=4
    $region2: #{tpu_custom_call.1} parent=1 // loop_pre_header
      _
    $region3: #{tpu_custom_call.1} parent=1 // loop_header
      %s22 = sphi 0, %s26
      %p23 = scmp.ge.s32.totalorder %s22, 4
      %s32 = sphi 0, %s34
      %s35 = sphi 0, %s32
      %s36 = sphi 0, %s35
      %s52 = sphi 0, %s36
      %s56 = sphi 0, %s56
      %s58 = sphi 0, %s56
      %s59 = sphi 0, %s58
      %s73 = sphi 0, %s59
      %s77 = sphi 0, %s77
      %s79 = sphi 0, %s77
      %s80 = sphi 0, %s79
      %s94 = sphi 0, %s80
      %s98 = sphi 0, %s98
      %s100 = sphi 0, %s98
      %s101 = sphi 0, %s100
      %s115 = sphi 0, %s101
      %s119 = sphi 0, %s119
      %s121 = sphi 0, %s119
      %s122 = sphi 0, %s121
      %s136 = sphi 0, %s122
      %s140 = sphi 0, %s140
      %s142 = sphi 0, %s140
      %s143 = sphi 0, %s142
      %s157 = sphi 0, %s143
      %s161 = sphi 0, %s161
      %s163 = sphi 0, %s161
      %s164 = sphi 0, %s163
      %s178 = sphi 0, %s164
      %s182 = sphi 0, %s182
      %s184 = sphi 0, %s182
      %s185 = sphi 0, %s184
      %s199 = sphi 0, %s185
      %s203 = sphi 0, %s203
      %s205 = sphi 0, %s203
      %s206 = sphi 0, %s205
      %s220 = sphi 0, %s206
      %s224 = sphi 0, %s224
      %s226 = sphi 0, %s224
      %s227 = sphi 0, %s226
      %s241 = sphi 0, %s227
      %s245 = sphi 0, %s245
      %s247 = sphi 0, %s245
      %s248 = sphi 0, %s247
      %s262 = sphi 0, %s248
      %s266 = sphi 0, %s266
      %s268 = sphi 0, %s266
      %s269 = sphi 0, %s268
      %s283 = sphi 0, %s269
      %s287 = sphi 0, %s287
      %s289 = sphi 0, %s287
      %s290 = sphi 0, %s289
      %s304 = sphi 0, %s290
      %s310 = sphi 0, %s312
      %s313 = sphi 0, %s310
      %s314 = sphi 0, %s313
      %s330 = sphi 0, %s314
    $region4: #{tpu_custom_call.1} parent=1 // loop_header_branch
      %25 = sbr.rel (%p23) target = $region8
    $region5: #{tpu_custom_call.1} parent=1 // loop_body
      %s27 = ssub.s32 %s22, 1
      %s28 = ssub.s32 %s22, 2
      %s29 = sadd.s32 %s22, 1
      %s30 = ssub.s32 %s22, %s29
      %p31 = scmp.eq.s32.totalorder %s30, 0
      %s33 = sadd.s32 %s32, 1
      %s34 = scalar_select %p31, %s32, %s33
      %p37 = pneg %p31
      %p38 = scmp.eq.s32.totalorder %s22, 1
      %p39 = por %p37, %p38
      %p40 = scmp.ne.s32.totalorder %s32, %s35
      %p41 = scmp.eq.s32.totalorder %s22, 0
      %p42 = por %p40, %p41
      %p43 = scmp.ne.s32.totalorder %s32, %s35
      %p44 = scmp.eq.s32.totalorder %s27, 1
      %p45 = por %p43, %p44
      %p46 = scmp.ne.s32.totalorder %s35, %s36
      %p47 = scmp.eq.s32.totalorder %s27, 0
      %p48 = por %p46, %p47
      %p49 = scmp.ne.s32.totalorder %s35, %s36
      %p50 = scmp.eq.s32.totalorder %s28, 1
      %p51 = por %p49, %p50
      %p53 = scmp.ne.s32.totalorder %s36, %s52
      %p54 = scmp.eq.s32.totalorder %s28, 0
      %p55 = por %p53, %p54
      %s57 = sadd.s32 %s56, 1
      %p60 = scmp.eq.s32.totalorder %s22, 1
      %p61 = scmp.ne.s32.totalorder %s56, %s58
      %p62 = scmp.eq.s32.totalorder %s22, 0
      %p63 = por %p61, %p62
      %p64 = scmp.ne.s32.totalorder %s56, %s58
      %p65 = scmp.eq.s32.totalorder %s27, 1
      %p66 = por %p64, %p65
      %p67 = scmp.ne.s32.totalorder %s58, %s59
      %p68 = scmp.eq.s32.totalorder %s27, 0
      %p69 = por %p67, %p68
      %p70 = scmp.ne.s32.totalorder %s58, %s59
      %p71 = scmp.eq.s32.totalorder %s28, 1
      %p72 = por %p70, %p71
      %p74 = scmp.ne.s32.totalorder %s59, %s73
      %p75 = scmp.eq.s32.totalorder %s28, 0
      %p76 = por %p74, %p75
      %s78 = sadd.s32 %s77, 1
      %p81 = scmp.eq.s32.totalorder %s22, 1
      %p82 = scmp.ne.s32.totalorder %s77, %s79
      %p83 = scmp.eq.s32.totalorder %s22, 0
      %p84 = por %p82, %p83
      %p85 = scmp.ne.s32.totalorder %s77, %s79
      %p86 = scmp.eq.s32.totalorder %s27, 1
      %p87 = por %p85, %p86
      %p88 = scmp.ne.s32.totalorder %s79, %s80
      %p89 = scmp.eq.s32.totalorder %s27, 0
      %p90 = por %p88, %p89
      %p91 = scmp.ne.s32.totalorder %s79, %s80
      %p92 = scmp.eq.s32.totalorder %s28, 1
      %p93 = por %p91, %p92
      %p95 = scmp.ne.s32.totalorder %s80, %s94
      %p96 = scmp.eq.s32.totalorder %s28, 0
      %p97 = por %p95, %p96
      %s99 = sadd.s32 %s98, 1
      %p102 = scmp.eq.s32.totalorder %s22, 1
      %p103 = scmp.ne.s32.totalorder %s98, %s100
      %p104 = scmp.eq.s32.totalorder %s22, 0
      %p105 = por %p103, %p104
      %p106 = scmp.ne.s32.totalorder %s98, %s100
      %p107 = scmp.eq.s32.totalorder %s27, 1
      %p108 = por %p106, %p107
      %p109 = scmp.ne.s32.totalorder %s100, %s101
      %p110 = scmp.eq.s32.totalorder %s27, 0
      %p111 = por %p109, %p110
      %p112 = scmp.ne.s32.totalorder %s100, %s101
      %p113 = scmp.eq.s32.totalorder %s28, 1
      %p114 = por %p112, %p113
      %p116 = scmp.ne.s32.totalorder %s101, %s115
      %p117 = scmp.eq.s32.totalorder %s28, 0
      %p118 = por %p116, %p117
      %s120 = sadd.s32 %s119, 1
      %p123 = scmp.eq.s32.totalorder %s22, 1
      %p124 = scmp.ne.s32.totalorder %s119, %s121
      %p125 = scmp.eq.s32.totalorder %s22, 0
      %p126 = por %p124, %p125
      %p127 = scmp.ne.s32.totalorder %s119, %s121
      %p128 = scmp.eq.s32.totalorder %s27, 1
      %p129 = por %p127, %p128
      %p130 = scmp.ne.s32.totalorder %s121, %s122
      %p131 = scmp.eq.s32.totalorder %s27, 0
      %p132 = por %p130, %p131
      %p133 = scmp.ne.s32.totalorder %s121, %s122
      %p134 = scmp.eq.s32.totalorder %s28, 1
      %p135 = por %p133, %p134
      %p137 = scmp.ne.s32.totalorder %s122, %s136
      %p138 = scmp.eq.s32.totalorder %s28, 0
      %p139 = por %p137, %p138
      %s141 = sadd.s32 %s140, 1
      %p144 = scmp.eq.s32.totalorder %s22, 1
      %p145 = scmp.ne.s32.totalorder %s140, %s142
      %p146 = scmp.eq.s32.totalorder %s22, 0
      %p147 = por %p145, %p146
      %p148 = scmp.ne.s32.totalorder %s140, %s142
      %p149 = scmp.eq.s32.totalorder %s27, 1
      %p150 = por %p148, %p149
      %p151 = scmp.ne.s32.totalorder %s142, %s143
      %p152 = scmp.eq.s32.totalorder %s27, 0
      %p153 = por %p151, %p152
      %p154 = scmp.ne.s32.totalorder %s142, %s143
      %p155 = scmp.eq.s32.totalorder %s28, 1
      %p156 = por %p154, %p155
      %p158 = scmp.ne.s32.totalorder %s143, %s157
      %p159 = scmp.eq.s32.totalorder %s28, 0
      %p160 = por %p158, %p159
      %s162 = sadd.s32 %s161, 1
      %p165 = scmp.eq.s32.totalorder %s22, 1
      %p166 = scmp.ne.s32.totalorder %s161, %s163
      %p167 = scmp.eq.s32.totalorder %s22, 0
      %p168 = por %p166, %p167
      %p169 = scmp.ne.s32.totalorder %s161, %s163
      %p170 = scmp.eq.s32.totalorder %s27, 1
      %p171 = por %p169, %p170
      %p172 = scmp.ne.s32.totalorder %s163, %s164
      %p173 = scmp.eq.s32.totalorder %s27, 0
      %p174 = por %p172, %p173
      %p175 = scmp.ne.s32.totalorder %s163, %s164
      %p176 = scmp.eq.s32.totalorder %s28, 1
      %p177 = por %p175, %p176
      %p179 = scmp.ne.s32.totalorder %s164, %s178
      %p180 = scmp.eq.s32.totalorder %s28, 0
      %p181 = por %p179, %p180
      %s183 = sadd.s32 %s182, 1
      %p186 = scmp.eq.s32.totalorder %s22, 1
      %p187 = scmp.ne.s32.totalorder %s182, %s184
      %p188 = scmp.eq.s32.totalorder %s22, 0
      %p189 = por %p187, %p188
      %p190 = scmp.ne.s32.totalorder %s182, %s184
      %p191 = scmp.eq.s32.totalorder %s27, 1
      %p192 = por %p190, %p191
      %p193 = scmp.ne.s32.totalorder %s184, %s185
      %p194 = scmp.eq.s32.totalorder %s27, 0
      %p195 = por %p193, %p194
      %p196 = scmp.ne.s32.totalorder %s184, %s185
      %p197 = scmp.eq.s32.totalorder %s28, 1
      %p198 = por %p196, %p197
      %p200 = scmp.ne.s32.totalorder %s185, %s199
      %p201 = scmp.eq.s32.totalorder %s28, 0
      %p202 = por %p200, %p201
      %s204 = sadd.s32 %s203, 1
      %p207 = scmp.eq.s32.totalorder %s22, 1
      %p208 = scmp.ne.s32.totalorder %s203, %s205
      %p209 = scmp.eq.s32.totalorder %s22, 0
      %p210 = por %p208, %p209
      %p211 = scmp.ne.s32.totalorder %s203, %s205
      %p212 = scmp.eq.s32.totalorder %s27, 1
      %p213 = por %p211, %p212
      %p214 = scmp.ne.s32.totalorder %s205, %s206
      %p215 = scmp.eq.s32.totalorder %s27, 0
      %p216 = por %p214, %p215
      %p217 = scmp.ne.s32.totalorder %s205, %s206
      %p218 = scmp.eq.s32.totalorder %s28, 1
      %p219 = por %p217, %p218
      %p221 = scmp.ne.s32.totalorder %s206, %s220
      %p222 = scmp.eq.s32.totalorder %s28, 0
      %p223 = por %p221, %p222
      %s225 = sadd.s32 %s224, 1
      %p228 = scmp.eq.s32.totalorder %s22, 1
      %p229 = scmp.ne.s32.totalorder %s224, %s226
      %p230 = scmp.eq.s32.totalorder %s22, 0
      %p231 = por %p229, %p230
      %p232 = scmp.ne.s32.totalorder %s224, %s226
      %p233 = scmp.eq.s32.totalorder %s27, 1
      %p234 = por %p232, %p233
      %p235 = scmp.ne.s32.totalorder %s226, %s227
      %p236 = scmp.eq.s32.totalorder %s27, 0
      %p237 = por %p235, %p236
      %p238 = scmp.ne.s32.totalorder %s226, %s227
      %p239 = scmp.eq.s32.totalorder %s28, 1
      %p240 = por %p238, %p239
      %p242 = scmp.ne.s32.totalorder %s227, %s241
      %p243 = scmp.eq.s32.totalorder %s28, 0
      %p244 = por %p242, %p243
      %s246 = sadd.s32 %s245, 1
      %p249 = scmp.eq.s32.totalorder %s22, 1
      %p250 = scmp.ne.s32.totalorder %s245, %s247
      %p251 = scmp.eq.s32.totalorder %s22, 0
      %p252 = por %p250, %p251
      %p253 = scmp.ne.s32.totalorder %s245, %s247
      %p254 = scmp.eq.s32.totalorder %s27, 1
      %p255 = por %p253, %p254
      %p256 = scmp.ne.s32.totalorder %s247, %s248
      %p257 = scmp.eq.s32.totalorder %s27, 0
      %p258 = por %p256, %p257
      %p259 = scmp.ne.s32.totalorder %s247, %s248
      %p260 = scmp.eq.s32.totalorder %s28, 1
      %p261 = por %p259, %p260
      %p263 = scmp.ne.s32.totalorder %s248, %s262
      %p264 = scmp.eq.s32.totalorder %s28, 0
      %p265 = por %p263, %p264
      %s267 = sadd.s32 %s266, 1
      %p270 = scmp.eq.s32.totalorder %s22, 1
      %p271 = scmp.ne.s32.totalorder %s266, %s268
      %p272 = scmp.eq.s32.totalorder %s22, 0
      %p273 = por %p271, %p272
      %p274 = scmp.ne.s32.totalorder %s266, %s268
      %p275 = scmp.eq.s32.totalorder %s27, 1
      %p276 = por %p274, %p275
      %p277 = scmp.ne.s32.totalorder %s268, %s269
      %p278 = scmp.eq.s32.totalorder %s27, 0
      %p279 = por %p277, %p278
      %p280 = scmp.ne.s32.totalorder %s268, %s269
      %p281 = scmp.eq.s32.totalorder %s28, 1
      %p282 = por %p280, %p281
      %p284 = scmp.ne.s32.totalorder %s269, %s283
      %p285 = scmp.eq.s32.totalorder %s28, 0
      %p286 = por %p284, %p285
      %s288 = sadd.s32 %s287, 1
      %p291 = scmp.eq.s32.totalorder %s22, 1
      %p292 = scmp.ne.s32.totalorder %s287, %s289
      %p293 = scmp.eq.s32.totalorder %s22, 0
      %p294 = por %p292, %p293
      %p295 = scmp.ne.s32.totalorder %s287, %s289
      %p296 = scmp.eq.s32.totalorder %s27, 1
      %p297 = por %p295, %p296
      %p298 = scmp.ne.s32.totalorder %s289, %s290
      %p299 = scmp.eq.s32.totalorder %s27, 0
      %p300 = por %p298, %p299
      %p301 = scmp.ne.s32.totalorder %s289, %s290
      %p302 = scmp.eq.s32.totalorder %s28, 1
      %p303 = por %p301, %p302
      %p305 = scmp.ne.s32.totalorder %s290, %s304
      %p306 = scmp.eq.s32.totalorder %s28, 0
      %p307 = por %p305, %p306
      %s308 = ssub.s32 %s22, %s29
      %p309 = scmp.eq.s32.totalorder %s308, 0
      %s311 = sadd.s32 %s310, 1
      %s312 = scalar_select %p309, %s310, %s311
      %p315 = pneg %p309
      %p316 = scmp.eq.s32.totalorder %s22, 1
      %p317 = por %p315, %p316
      %p318 = scmp.ne.s32.totalorder %s310, %s313
      %p319 = scmp.eq.s32.totalorder %s22, 0
      %p320 = por %p318, %p319
      %p321 = scmp.ne.s32.totalorder %s310, %s313
      %p322 = scmp.eq.s32.totalorder %s27, 1
      %p323 = por %p321, %p322
      %p324 = scmp.ne.s32.totalorder %s313, %s314
      %p325 = scmp.eq.s32.totalorder %s27, 0
      %p326 = por %p324, %p325
      %p327 = scmp.ne.s32.totalorder %s313, %s314
      %p328 = scmp.eq.s32.totalorder %s28, 1
      %p329 = por %p327, %p328
      %p331 = scmp.ne.s32.totalorder %s314, %s330
      %p332 = scmp.eq.s32.totalorder %s28, 0
      %p333 = por %p331, %p332
      %p334 = scmp.le.s32.totalorder 1, %s22
      %p335 = scmp.lt.s32.totalorder %s22, 3
      %p336 = pnand %p334, %p335
      %p337 = pneg %p336
      // Predicated region
      $region9: #{tpu_custom_call.1} parent=5 // pred_check
        _
      $region10: #{tpu_custom_call.1} parent=5 // pred_check_branch
        %339 = sbr.rel (%p336) target = $region12
      $region11: #{tpu_custom_call.1} parent=5 // pred_region
        %s340 = ssub.s32 %s22, 1
        // Predicated region
        $region13: #{tpu_custom_call.1} parent=11 // pred_check
          %p341 = pneg %p69
        $region14: #{tpu_custom_call.1} parent=11 // pred_check_branch
          %343 = sbr.rel (%p341) target = $region16
        $region15: #{tpu_custom_call.1} parent=11 // pred_region
          _
        $region16: #{tpu_custom_call.1} parent=11 // pred_fallthru
          _
        // Predicated region
        $region17: #{tpu_custom_call.1} parent=11 // pred_check
          %p344 = pneg %p90
        $region18: #{tpu_custom_call.1} parent=11 // pred_check_branch
          %346 = sbr.rel (%p344) target = $region20
        $region19: #{tpu_custom_call.1} parent=11 // pred_region
          _
        $region20: #{tpu_custom_call.1} parent=11 // pred_fallthru
          _
        // Predicated region
        $region21: #{tpu_custom_call.1} parent=11 // pred_check
          %p347 = pneg %p111
        $region22: #{tpu_custom_call.1} parent=11 // pred_check_branch
          %349 = sbr.rel (%p347) target = $region24
        $region23: #{tpu_custom_call.1} parent=11 // pred_region
          _
        $region24: #{tpu_custom_call.1} parent=11 // pred_fallthru
          _
        // Predicated region
        $region25: #{tpu_custom_call.1} parent=11 // pred_check
          %p350 = pneg %p132
        $region26: #{tpu_custom_call.1} parent=11 // pred_check_branch
          %352 = sbr.rel (%p350) target = $region28
        $region27: #{tpu_custom_call.1} parent=11 // pred_region
          _
        $region28: #{tpu_custom_call.1} parent=11 // pred_fallthru
          _
        // Predicated region
        $region29: #{tpu_custom_call.1} parent=11 // pred_check
          %p353 = pneg %p153
        $region30: #{tpu_custom_call.1} parent=11 // pred_check_branch
          %355 = sbr.rel (%p353) target = $region32
        $region31: #{tpu_custom_call.1} parent=11 // pred_region
          _
        $region32: #{tpu_custom_call.1} parent=11 // pred_fallthru
          _
        // Predicated region
        $region33: #{tpu_custom_call.1} parent=11 // pred_check
          %p356 = pneg %p174
        $region34: #{tpu_custom_call.1} parent=11 // pred_check_branch
          %358 = sbr.rel (%p356) target = $region36
        $region35: #{tpu_custom_call.1} parent=11 // pred_region
          _
        $region36: #{tpu_custom_call.1} parent=11 // pred_fallthru
          _
        // Predicated region
        $region37: #{tpu_custom_call.1} parent=11 // pred_check
          %p359 = pneg %p195
        $region38: #{tpu_custom_call.1} parent=11 // pred_check_branch
          %361 = sbr.rel (%p359) target = $region40
        $region39: #{tpu_custom_call.1} parent=11 // pred_region
          _
        $region40: #{tpu_custom_call.1} parent=11 // pred_fallthru
          _
        // Predicated region
        $region41: #{tpu_custom_call.1} parent=11 // pred_check
          %p362 = pneg %p216
        $region42: #{tpu_custom_call.1} parent=11 // pred_check_branch
          %364 = sbr.rel (%p362) target = $region44
        $region43: #{tpu_custom_call.1} parent=11 // pred_region
          _
        $region44: #{tpu_custom_call.1} parent=11 // pred_fallthru
          _
        // Predicated region
        $region45: #{tpu_custom_call.1} parent=11 // pred_check
          %p365 = pneg %p237
        $region46: #{tpu_custom_call.1} parent=11 // pred_check_branch
          %367 = sbr.rel (%p365) target = $region48
        $region47: #{tpu_custom_call.1} parent=11 // pred_region
          _
        $region48: #{tpu_custom_call.1} parent=11 // pred_fallthru
          _
        // Predicated region
        $region49: #{tpu_custom_call.1} parent=11 // pred_check
          %p368 = pneg %p258
        $region50: #{tpu_custom_call.1} parent=11 // pred_check_branch
          %370 = sbr.rel (%p368) target = $region52
        $region51: #{tpu_custom_call.1} parent=11 // pred_region
          _
        $region52: #{tpu_custom_call.1} parent=11 // pred_fallthru
          _
        // Predicated region
        $region53: #{tpu_custom_call.1} parent=11 // pred_check
          %p371 = pneg %p279
        $region54: #{tpu_custom_call.1} parent=11 // pred_check_branch
          %373 = sbr.rel (%p371) target = $region56
        $region55: #{tpu_custom_call.1} parent=11 // pred_region
          _
        $region56: #{tpu_custom_call.1} parent=11 // pred_fallthru
          _
        // Predicated region
        $region57: #{tpu_custom_call.1} parent=11 // pred_check
          %p374 = pneg %p300
        $region58: #{tpu_custom_call.1} parent=11 // pred_check_branch
          %376 = sbr.rel (%p374) target = $region60
        $region59: #{tpu_custom_call.1} parent=11 // pred_region
          _
        $region60: #{tpu_custom_call.1} parent=11 // pred_fallthru
          _
      $region12: #{tpu_custom_call.1} parent=5 // pred_fallthru
        _
      %p377 = scmp.lt.s32.totalorder %s22, 2
      // Predicated region
      $region61: #{tpu_custom_call.1} parent=5 // pred_check
        %p378 = pneg %p377
      $region62: #{tpu_custom_call.1} parent=5 // pred_check_branch
        %380 = sbr.rel (%p378) target = $region64
      $region63: #{tpu_custom_call.1} parent=5 // pred_region
        // Predicated region
        $region65: #{tpu_custom_call.1} parent=63 // pred_check
          %p381 = pneg %p42
        $region66: #{tpu_custom_call.1} parent=63 // pred_check_branch
          %383 = sbr.rel (%p381) target = $region68
        $region67: #{tpu_custom_call.1} parent=63 // pred_region
          %p384 = scmp.lt.s32.totalorder %s22, 1
          %s385 = scalar_select %p384, %s22, 1
          %s386 = smul.addr %s385, 8
          %s387 = scalar_lea.vmem %s0, %s386
        $region68: #{tpu_custom_call.1} parent=63 // pred_fallthru
          _
      $region64: #{tpu_custom_call.1} parent=5 // pred_fallthru
        _
      %p388 = scmp.le.s32.totalorder 1, %s22
      %p389 = scmp.lt.s32.totalorder %s22, 3
      %p390 = pnand %p388, %p389
      %p391 = pneg %p390
      // Predicated region
      $region69: #{tpu_custom_call.1} parent=5 // pred_check
        _
      $region70: #{tpu_custom_call.1} parent=5 // pred_check_branch
        %393 = sbr.rel (%p390) target = $region72
      $region71: #{tpu_custom_call.1} parent=5 // pred_region
        %s394 = ssub.s32 %s22, 1
        %p395 = scmp.lt.s32.totalorder %s27, 1
        %s396 = scalar_select %p395, %s27, 1
        %s397 = smul.addr %s396, 8
        %s398 = scalar_lea.vmem %s0, %s397
        %p399 = pneg %p48
        %p400 = pneg %p45
        %p401 = pneg %p69
        %p402 = pneg %p66
        %p403 = pneg %p90
        %p404 = pneg %p87
        %p405 = pneg %p111
        %p406 = pneg %p108
        %p407 = pneg %p132
        %p408 = pneg %p129
        %p409 = pneg %p153
        %p410 = pneg %p150
        %p411 = pneg %p174
        %p412 = pneg %p171
        %p413 = pneg %p195
        %p414 = pneg %p192
        %p415 = pneg %p216
        %p416 = pneg %p213
        %p417 = pneg %p237
        %p418 = pneg %p234
        %p419 = pneg %p258
        %p420 = pneg %p255
        %p421 = pneg %p279
        %p422 = pneg %p276
        %p423 = pneg %p300
        %p424 = pneg %p297
        %p425 = pneg %p326
        %p426 = pneg %p323
        %s427 = sand.u32 %s313, 1
        %s428 = scalar_lea.sflag [#allocation3], %s427
        %s429 = sand.u32 %s313, 1
        %s430 = smul.addr %s429, 8
        %s431 = scalar_lea.vmem [#allocation2], %s430
        %p432 = scmp.lt.s32.totalorder %s27, 1
        %s433 = scalar_select %p432, %s27, 1
        %s434 = smul.addr %s433, 8
        %s435 = scalar_lea.vmem %s0, %s434
        %v437 = vld [vmem:[%s435] sm:$0xff]
        %v438 = vld [vmem:[%s1] sm:$0x1]
        %v439 = vld [vmem:[%s2] sm:$0x1]
        %vm440 = vcmask 261120
        %v441 = vsel %vm440, %v437, 0.0
        %442 = vadd.xlane.f32.xlu0 %v441
        %v443 = vpop.xlane.xlu0 %442
        %v444 = vrcp.pop 32.0
        %v445 = vmul.f32 32.0, %v444
        %v446 = vsub.f32 1.0, %v445
        %v447 = vmul.f32 %v444, %v446
        %v448 = vadd.f32 %v444, %v447
        %vm449 = vweird.f32 %v444
        %v450 = vsel %vm449, %v444, %v448
        %v451 = vmul.f32 %v443, %v450
        %v452 = vsub.f32 %v437, %v451
        %v453 = vmul.f32 %v452, %v452
        %v454 = vsel %vm440, %v453, 0.0
        %455 = vadd.xlane.f32.xlu0 %v454
        %v456 = vpop.xlane.xlu0 %455
        %v457 = vmul.f32 %v456, %v450
        %v458 = vadd.f32 %v457, 1e-06
        %v459 = vrsqrt.pop %v458
        %v460 = vmul.f32 %v459, %v458
        %v461 = vmul.f32 %v460, %v459
        %v462 = vmul.f32 0.5, %v461
        %v463 = vsub.f32 1.5, %v462
        %v464 = vmul.f32 %v459, %v463
        %vm465 = vweird.f32 %v458
        %vm466 = vweird.f32 %v459
        %vm467 = vmor %vm465, %vm466
        %v468 = vsel %vm467, %v459, %v464
        %v469 = vmul.f32 %v452, %v468
        %v471 = vperm.slane %v438, 0
        %v473 = vmul.f32 %v469, %v471
        %v475 = vperm.slane %v439, 0
        %v477 = vadd.f32 %v473, %v475
        %v478 = vpack.c.bf16 %v477, %v477
        %v479 = vld [vmem:[%s3] sm:$0xf]
        %v480 = vld [vmem:[%s3 + $0x4] sm:$0xf]
        %v481 = vld [vmem:[%s3 + $0x8] sm:$0xf]
        %v482 = vld [vmem:[%s3 + $0xc] sm:$0xf]
        %v483 = vld [vmem:[%s4] sm:$0x1]
        %v485 = vperm.slane %v483, 0
        %v491 = vunpack.c.l.b16 %v479
        %v492 = vunpack.c.l.b16 %v480
        %v493 = vunpack.c.l.b16 %v481
        %v494 = vunpack.c.l.b16 %v482
        %v495 = vpack.c.b16 %v492, %v491
        %v496 = vpack.c.b16 %v494, %v493
        %v500 = vsel %vm440, %v478, 0
        %502 = vmatpush.bf16.msra.mxu0 0
        %503 = vmatpush.bf16.msra.mxu0 0
        %504 = vmatpush.bf16.msra.mxu0 0
        %505 = vmatpush.bf16.msra.mxu0 0
        %506 = vmatpush.bf16.msra.mxu0 0
        %507 = vmatpush.bf16.msra.mxu0 0
        %508 = vmatpush.bf16.msra.mxu0 %v496
        %509 = vmatpush.bf16.msra.mxu0 %v495
        %510 = vmatmul.bf16.gmra.mxu0 %v500
        %v511 = vpop.f32.mrf.mxu0
        %v512 = vadd.f32 %v485, %v511
        %v513 = vpop.f32.mrf.mxu0
        %514 = vdwg.mxu0
        %516 = vrot.lane.b32.xlu0 %v512, 120
        %v517 = vpop.permute.xlu0 %516
        %519 = vrot.lane.b32.xlu0 %v512, 112
        %v520 = vpop.permute.xlu0 %519
        %522 = vrot.lane.b32.xlu0 %v512, 104
        %v523 = vpop.permute.xlu0 %522
        %v525 = vpack.c.bf16 %v512, %v512
        %v526 = vpack.c.bf16 %v517, %v517
        %v527 = vpack.c.bf16 %v520, %v520
        %v528 = vpack.c.bf16 %v523, %v523
        %v530 = vunpack.c.l.b16 %v525
        %v531 = vpack.c.b16 %v530, %v530
        %532 = vrot.lane.b32.xlu0 %v531, 96
        %v533 = vpop.permute.xlu0 %532
        %vm534 = vcmask 64512
        %v536 = vsel %vm534, %v525, 0
        %v539 = vsel %vm534, %v533, 0
        %541 = vmatpush.bf16.xpose.msra.mxu0 0
        %542 = vmatpush.bf16.xpose.msra.mxu0 0
        %543 = vmatpush.bf16.xpose.msra.mxu0 0
        %544 = vmatpush.bf16.xpose.msra.mxu0 0
        %545 = vmatpush.bf16.xpose.msra.mxu0 0
        %546 = vmatpush.bf16.xpose.msra.mxu0 0
        %547 = vmatpush.bf16.xpose.msra.mxu0 0
        %548 = vmatpush.bf16.xpose.msra.mxu0 %v539
        %549 = vmatmul.bf16.gmra.mxu0 %v536
        %v550 = vpop.f32.mrf.mxu0
        %v551 = vadd.f32 0.0, %v550
        %v552 = vpop.f32.mrf.mxu0
        %553 = vdwg.mxu0
        %v555 = vunpack.c.l.b16 %v526
        %v556 = vpack.c.b16 %v555, %v555
        %557 = vrot.lane.b32.xlu0 %v556, 96
        %v558 = vpop.permute.xlu0 %557
        %v560 = vsel %vm534, %v526, 0
        %v563 = vsel %vm534, %v558, 0
        %565 = vmatpush.bf16.xpose.msra.mxu0 0
        %566 = vmatpush.bf16.xpose.msra.mxu0 0
        %567 = vmatpush.bf16.xpose.msra.mxu0 0
        %568 = vmatpush.bf16.xpose.msra.mxu0 0
        %569 = vmatpush.bf16.xpose.msra.mxu0 0
        %570 = vmatpush.bf16.xpose.msra.mxu0 0
        %571 = vmatpush.bf16.xpose.msra.mxu0 0
        %572 = vmatpush.bf16.xpose.msra.mxu0 %v563
        %573 = vmatmul.bf16.gmra.mxu0 %v560
        %v574 = vpop.f32.mrf.mxu0
        %v575 = vadd.f32 0.0, %v574
        %v576 = vpop.f32.mrf.mxu0
        %577 = vdwg.mxu0
        %v579 = vunpack.c.l.b16 %v527
        %v580 = vpack.c.b16 %v579, %v579
        %581 = vrot.lane.b32.xlu0 %v580, 96
        %v582 = vpop.permute.xlu0 %581
        %v584 = vsel %vm534, %v527, 0
        %v587 = vsel %vm534, %v582, 0
        %589 = vmatpush.bf16.xpose.msra.mxu0 0
        %590 = vmatpush.bf16.xpose.msra.mxu0 0
        %591 = vmatpush.bf16.xpose.msra.mxu0 0
        %592 = vmatpush.bf16.xpose.msra.mxu0 0
        %593 = vmatpush.bf16.xpose.msra.mxu0 0
        %594 = vmatpush.bf16.xpose.msra.mxu0 0
        %595 = vmatpush.bf16.xpose.msra.mxu0 0
        %596 = vmatpush.bf16.xpose.msra.mxu0 %v587
        %597 = vmatmul.bf16.gmra.mxu0 %v584
        %v598 = vpop.f32.mrf.mxu0
        %v599 = vadd.f32 0.0, %v598
        %v600 = vpop.f32.mrf.mxu0
        %601 = vdwg.mxu0
        %v603 = vunpack.c.l.b16 %v528
        %v604 = vpack.c.b16 %v603, %v603
        %605 = vrot.lane.b32.xlu0 %v604, 96
        %v606 = vpop.permute.xlu0 %605
        %v608 = vsel %vm534, %v528, 0
        %v611 = vsel %vm534, %v606, 0
        %613 = vmatpush.bf16.xpose.msra.mxu0 0
        %614 = vmatpush.bf16.xpose.msra.mxu0 0
        %615 = vmatpush.bf16.xpose.msra.mxu0 0
        %616 = vmatpush.bf16.xpose.msra.mxu0 0
        %617 = vmatpush.bf16.xpose.msra.mxu0 0
        %618 = vmatpush.bf16.xpose.msra.mxu0 0
        %619 = vmatpush.bf16.xpose.msra.mxu0 0
        %620 = vmatpush.bf16.xpose.msra.mxu0 %v611
        %621 = vmatmul.bf16.gmra.mxu0 %v608
        %v622 = vpop.f32.mrf.mxu0
        %v623 = vadd.f32 0.0, %v622
        %v624 = vpop.f32.mrf.mxu0
        %625 = vdwg.mxu0
        %v626 = vsel %vm534, %v551, -inf
        %627 = vmax.xlane.f32.xlu0 %v626
        %v628 = vpop.xlane.xlu0 %627
        %v629 = vsel %vm534, %v575, -inf
        %630 = vmax.xlane.f32.xlu0 %v629
        %v631 = vpop.xlane.xlu0 %630
        %v632 = vsel %vm534, %v599, -inf
        %633 = vmax.xlane.f32.xlu0 %v632
        %v634 = vpop.xlane.xlu0 %633
        %v635 = vsel %vm534, %v623, -inf
        %636 = vmax.xlane.f32.xlu0 %v635
        %v637 = vpop.xlane.xlu0 %636
        %v638 = vsub.f32 %v551, %v628
        %v639 = vsub.f32 %v575, %v631
        %v640 = vsub.f32 %v599, %v634
        %v641 = vsub.f32 %v623, %v637
        %v642 = vmul.f32 %v638, 1.442695
        %v643 = vpow.pop %v642
        %v644 = vmul.f32 %v639, 1.442695
        %v645 = vpow.pop %v644
        %v646 = vmul.f32 %v640, 1.442695
        %v647 = vpow.pop %v646
        %v648 = vmul.f32 %v641, 1.442695
        %v649 = vpow.pop %v648
        %v650 = vsel %vm534, %v643, 0.0
        %651 = vadd.xlane.f32.xlu0 %v650
        %v652 = vpop.xlane.xlu0 %651
        %v653 = vsel %vm534, %v645, 0.0
        %654 = vadd.xlane.f32.xlu0 %v653
        %v655 = vpop.xlane.xlu0 %654
        %v656 = vsel %vm534, %v647, 0.0
        %657 = vadd.xlane.f32.xlu0 %v656
        %v658 = vpop.xlane.xlu0 %657
        %v659 = vsel %vm534, %v649, 0.0
        %660 = vadd.xlane.f32.xlu0 %v659
        %v661 = vpop.xlane.xlu0 %660
        %v662 = vrcp.pop %v652
        %v663 = vrcp.pop %v655
        %v664 = vrcp.pop %v658
        %v665 = vrcp.pop %v661
        %v666 = vmul.f32 %v643, %v662
        %v667 = vmul.f32 %v645, %v663
        %v668 = vmul.f32 %v647, %v664
        %v669 = vmul.f32 %v649, %v665
        %v670 = vpack.c.bf16 %v666, %v666
        %v671 = vpack.c.bf16 %v667, %v667
        %v672 = vpack.c.bf16 %v668, %v668
        %v673 = vpack.c.bf16 %v669, %v669
        %674 = vrot.lane.b32.xlu0 %v531, 64
        %v675 = vpop.permute.xlu0 %674
        %v677 = vsel %vm534, %v670, 0
        %vm679 = vcmask 1043456
        %v681 = vsel %vm679, %v675, 0
        %683 = vmatpush.bf16.msra.mxu0 0
        %684 = vmatpush.bf16.msra.mxu0 0
        %685 = vmatpush.bf16.msra.mxu0 0
        %686 = vmatpush.bf16.msra.mxu0 0
        %687 = vmatpush.bf16.msra.mxu0 0
        %688 = vmatpush.bf16.msra.mxu0 0
        %689 = vmatpush.bf16.msra.mxu0 0
        %690 = vmatpush.bf16.msra.mxu0 %v681
        %691 = vmatmul.bf16.gmra.mxu0 %v677
        %v692 = vpop.f32.mrf.mxu0
        %v693 = vadd.f32 0.0, %v692
        %v694 = vpop.f32.mrf.mxu0
        %695 = vdwg.mxu0
        %696 = vrot.lane.b32.xlu0 %v556, 64
        %v697 = vpop.permute.xlu0 %696
        %v699 = vsel %vm534, %v671, 0
        %v702 = vsel %vm679, %v697, 0
        %704 = vmatpush.bf16.msra.mxu0 0
        %705 = vmatpush.bf16.msra.mxu0 0
        %706 = vmatpush.bf16.msra.mxu0 0
        %707 = vmatpush.bf16.msra.mxu0 0
        %708 = vmatpush.bf16.msra.mxu0 0
        %709 = vmatpush.bf16.msra.mxu0 0
        %710 = vmatpush.bf16.msra.mxu0 0
        %711 = vmatpush.bf16.msra.mxu0 %v702
        %712 = vmatmul.bf16.gmra.mxu0 %v699
        %v713 = vpop.f32.mrf.mxu0
        %v714 = vadd.f32 0.0, %v713
        %v715 = vpop.f32.mrf.mxu0
        %716 = vdwg.mxu0
        %717 = vrot.lane.b32.xlu0 %v580, 64
        %v718 = vpop.permute.xlu0 %717
        %v720 = vsel %vm534, %v672, 0
        %v723 = vsel %vm679, %v718, 0
        %725 = vmatpush.bf16.msra.mxu0 0
        %726 = vmatpush.bf16.msra.mxu0 0
        %727 = vmatpush.bf16.msra.mxu0 0
        %728 = vmatpush.bf16.msra.mxu0 0
        %729 = vmatpush.bf16.msra.mxu0 0
        %730 = vmatpush.bf16.msra.mxu0 0
        %731 = vmatpush.bf16.msra.mxu0 0
        %732 = vmatpush.bf16.msra.mxu0 %v723
        %733 = vmatmul.bf16.gmra.mxu0 %v720
        %v734 = vpop.f32.mrf.mxu0
        %v735 = vadd.f32 0.0, %v734
        %v736 = vpop.f32.mrf.mxu0
        %737 = vdwg.mxu0
        %738 = vrot.lane.b32.xlu0 %v604, 64
        %v739 = vpop.permute.xlu0 %738
        %v741 = vsel %vm534, %v673, 0
        %v744 = vsel %vm679, %v739, 0
        %746 = vmatpush.bf16.msra.mxu0 0
        %747 = vmatpush.bf16.msra.mxu0 0
        %748 = vmatpush.bf16.msra.mxu0 0
        %749 = vmatpush.bf16.msra.mxu0 0
        %750 = vmatpush.bf16.msra.mxu0 0
        %751 = vmatpush.bf16.msra.mxu0 0
        %752 = vmatpush.bf16.msra.mxu0 0
        %753 = vmatpush.bf16.msra.mxu0 %v744
        %754 = vmatmul.bf16.gmra.mxu0 %v741
        %v755 = vpop.f32.mrf.mxu0
        %v756 = vadd.f32 0.0, %v755
        %v757 = vpop.f32.mrf.mxu0
        %758 = vdwg.mxu0
        %v759 = vpack.c.bf16 %v693, %v693
        %v760 = vpack.c.bf16 %v714, %v714
        %v761 = vpack.c.bf16 %v735, %v735
        %v762 = vpack.c.bf16 %v756, %v756
        %v763 = vld [vmem:[%s5] sm:$0xf]
        %v764 = vld [vmem:[%s5 + $0x4] sm:$0xf]
        %v766 = vsel %vm534, %v760, 0
        %v769 = vsel %vm679, %v764, 0
        %771 = vmatpush.bf16.msra.mxu0 0
        %772 = vmatpush.bf16.msra.mxu0 0
        %773 = vmatpush.bf16.msra.mxu0 0
        %774 = vmatpush.bf16.msra.mxu0 0
        %775 = vmatpush.bf16.msra.mxu0 0
        %776 = vmatpush.bf16.msra.mxu0 0
        %777 = vmatpush.bf16.msra.mxu0 0
        %778 = vmatpush.bf16.msra.mxu0 %v769
        %779 = vmatmul.bf16.gmra.mxu0 %v766
        %v780 = vpop.f32.mrf.mxu0
        %v781 = vadd.f32 0.0, %v780
        %v782 = vpop.f32.mrf.mxu0
        %783 = vdwg.mxu0
        %v785 = vsel %vm534, %v759, 0
        %v788 = vsel %vm679, %v763, 0
        %790 = vmatpush.bf16.msra.mxu0 0
        %791 = vmatpush.bf16.msra.mxu0 0
        %792 = vmatpush.bf16.msra.mxu0 0
        %793 = vmatpush.bf16.msra.mxu0 0
        %794 = vmatpush.bf16.msra.mxu0 0
        %795 = vmatpush.bf16.msra.mxu0 0
        %796 = vmatpush.bf16.msra.mxu0 0
        %797 = vmatpush.bf16.msra.mxu0 %v788
        %798 = vmatmul.bf16.gmra.mxu0 %v785
        %v799 = vpop.f32.mrf.mxu0
        %v800 = vadd.f32 %v781, %v799
        %v801 = vpop.f32.mrf.mxu0
        %802 = vdwg.mxu0
        %v803 = vld [vmem:[%s5 + $0x8] sm:$0xf]
        %v805 = vsel %vm534, %v761, 0
        %v808 = vsel %vm679, %v803, 0
        %810 = vmatpush.bf16.msra.mxu0 0
        %811 = vmatpush.bf16.msra.mxu0 0
        %812 = vmatpush.bf16.msra.mxu0 0
        %813 = vmatpush.bf16.msra.mxu0 0
        %814 = vmatpush.bf16.msra.mxu0 0
        %815 = vmatpush.bf16.msra.mxu0 0
        %816 = vmatpush.bf16.msra.mxu0 0
        %817 = vmatpush.bf16.msra.mxu0 %v808
        %818 = vmatmul.bf16.gmra.mxu0 %v805
        %v819 = vpop.f32.mrf.mxu0
        %v820 = vadd.f32 0.0, %v819
        %v821 = vpop.f32.mrf.mxu0
        %822 = vdwg.mxu0
        %v823 = vadd.f32 %v800, %v820
        %v824 = vld [vmem:[%s5 + $0xc] sm:$0xf]
        %v826 = vsel %vm534, %v762, 0
        %v829 = vsel %vm679, %v824, 0
        %831 = vmatpush.bf16.msra.mxu0 0
        %832 = vmatpush.bf16.msra.mxu0 0
        %833 = vmatpush.bf16.msra.mxu0 0
        %834 = vmatpush.bf16.msra.mxu0 0
        %835 = vmatpush.bf16.msra.mxu0 0
        %836 = vmatpush.bf16.msra.mxu0 0
        %837 = vmatpush.bf16.msra.mxu0 0
        %838 = vmatpush.bf16.msra.mxu0 %v829
        %839 = vmatmul.bf16.gmra.mxu0 %v826
        %v840 = vpop.f32.mrf.mxu0
        %v841 = vadd.f32 0.0, %v840
        %v842 = vpop.f32.mrf.mxu0
        %843 = vdwg.mxu0
        %v844 = vadd.f32 %v823, %v841
        %v845 = vld [vmem:[%s6] sm:$0x1]
        %v847 = vperm.slane %v845, 0
        %v849 = vadd.f32 %v844, %v847
        %v850 = vadd.f32 %v437, %v849
        %v851 = vld [vmem:[%s7] sm:$0x1]
        %v852 = vld [vmem:[%s8] sm:$0x1]
        %v853 = vsel %vm440, %v850, 0.0
        %854 = vadd.xlane.f32.xlu0 %v853
        %v855 = vpop.xlane.xlu0 %854
        %v856 = vmul.f32 %v855, %v450
        %v857 = vsub.f32 %v850, %v856
        %v858 = vmul.f32 %v857, %v857
        %v859 = vsel %vm440, %v858, 0.0
        %860 = vadd.xlane.f32.xlu0 %v859
        %v861 = vpop.xlane.xlu0 %860
        %v862 = vmul.f32 %v861, %v450
        %v863 = vadd.f32 %v862, 1e-06
        %v864 = vrsqrt.pop %v863
        %v865 = vmul.f32 %v864, %v863
        %v866 = vmul.f32 %v865, %v864
        %v867 = vmul.f32 0.5, %v866
        %v868 = vsub.f32 1.5, %v867
        %v869 = vmul.f32 %v864, %v868
        %vm870 = vweird.f32 %v863
        %vm871 = vweird.f32 %v864
        %vm872 = vmor %vm870, %vm871
        %v873 = vsel %vm872, %v864, %v869
        %v874 = vmul.f32 %v857, %v873
        %v876 = vperm.slane %v851, 0
        %v878 = vmul.f32 %v874, %v876
        %v880 = vperm.slane %v852, 0
        %v882 = vadd.f32 %v878, %v880
        %v883 = vpack.c.bf16 %v882, %v882
        %v884 = vld [vmem:[%s9] sm:$0xf]
        %v885 = vld [vmem:[%s9 + $0x4] sm:$0xf]
        %v886 = vld [vmem:[%s9 + $0x8] sm:$0xf]
        %v887 = vld [vmem:[%s9 + $0xc] sm:$0xf]
        %v888 = vld [vmem:[%s10] sm:$0x1]
        %v890 = vperm.slane %v888, 0
        %v896 = vunpack.c.l.b16 %v884
        %v897 = vunpack.c.l.b16 %v885
        %v898 = vunpack.c.l.b16 %v886
        %v899 = vunpack.c.l.b16 %v887
        %v900 = vpack.c.b16 %v897, %v896
        %v901 = vpack.c.b16 %v899, %v898
        %v905 = vsel %vm440, %v883, 0
        %907 = vmatpush.bf16.msra.mxu0 0
        %908 = vmatpush.bf16.msra.mxu0 0
        %909 = vmatpush.bf16.msra.mxu0 0
        %910 = vmatpush.bf16.msra.mxu0 0
        %911 = vmatpush.bf16.msra.mxu0 0
        %912 = vmatpush.bf16.msra.mxu0 0
        %913 = vmatpush.bf16.msra.mxu0 %v901
        %914 = vmatpush.bf16.msra.mxu0 %v900
        %915 = vmatmul.bf16.gmra.mxu0 %v905
        %v916 = vpop.f32.mrf.mxu0
        %v917 = vadd.f32 %v890, %v916
        %v918 = vpop.f32.mrf.mxu0
        %919 = vdwg.mxu0
        %v920 = vmul.f32 %v917, 0.5
        %v921 = vmul.f32 %v917, 0.70710677
        %v922 = vmul.f32 %v921, %v921
        %v923 = vmin.f32 16.0, %v922
        %v924 = vmul.f32 %v923, 2.1237322e-06
        %v925 = vadd.f32 %v924, 0.00028619796
        %v926 = vmul.f32 %v923, %v925
        %v927 = vadd.f32 %v926, 0.0036580483
        %v928 = vmul.f32 %v923, %v927
        %v929 = vadd.f32 %v928, 0.05243302
        %v930 = vmul.f32 %v923, %v929
        %v931 = vadd.f32 %v930, 0.18741608
        %v932 = vmul.f32 %v923, %v931
        %v933 = vadd.f32 %v932, 1.1283791
        %v934 = vmul.f32 %v921, %v933
        %v935 = vmul.f32 %v923, 3.8918573e-05
        %v936 = vadd.f32 %v935, 0.001143296
        %v937 = vmul.f32 %v923, %v936
        %v938 = vadd.f32 %v937, 0.014752088
        %v939 = vmul.f32 %v923, %v938
        %v940 = vadd.f32 %v939, 0.112945676
        %v941 = vmul.f32 %v923, %v940
        %v942 = vadd.f32 %v941, 0.4994258
        %v943 = vmul.f32 %v923, %v942
        %v944 = vadd.f32 %v943, 1.0
        %v945 = vrcp.pop %v944
        %v946 = vmul.f32 %v944, %v945
        %v947 = vsub.f32 1.0, %v946
        %v948 = vmul.f32 %v945, %v947
        %v949 = vadd.f32 %v945, %v948
        %vm950 = vweird.f32 %v944
        %vm951 = vweird.f32 %v945
        %vm952 = vmor %vm950, %vm951
        %v953 = vsel %vm952, %v945, %v949
        %v954 = vand.u32 2147483647, %v944
        %vm955 = vcmp.eq.f32.partialorder %v954, 8.507059e+37
        %v956 = vand.u32 %v944, 2147483648
        %v957 = vor.u32 1.1754944e-38, %v956
        %v958 = vsel %vm955, %v957, %v953
        %v959 = vmul.f32 %v934, %v958
        %v960 = vmin.f32 %v959, 1.0
        %v961 = vmax.f32 %v960, -1.0
        %v962 = vadd.f32 %v961, 1.0
        %v963 = vmul.f32 %v920, %v962
        %v964 = vpack.c.bf16 %v963, %v963
        %v965 = vld [vmem:[%s11] sm:$0xf]
        %v966 = vld [vmem:[%s11 + $0x4] sm:$0xf]
        %v967 = vld [vmem:[%s11 + $0x8] sm:$0xf]
        %v968 = vld [vmem:[%s11 + $0xc] sm:$0xf]
        %v969 = vld [vmem:[%s11 + $0x10] sm:$0xf]
        %v970 = vld [vmem:[%s11 + $0x14] sm:$0xf]
        %v971 = vld [vmem:[%s11 + $0x18] sm:$0xf]
        %v972 = vld [vmem:[%s11 + $0x1c] sm:$0xf]
        %v973 = vld [vmem:[%s11 + $0x20] sm:$0xf]
        %v974 = vld [vmem:[%s11 + $0x24] sm:$0xf]
        %v975 = vld [vmem:[%s11 + $0x28] sm:$0xf]
        %v976 = vld [vmem:[%s11 + $0x2c] sm:$0xf]
        %v977 = vld [vmem:[%s11 + $0x30] sm:$0xf]
        %v978 = vld [vmem:[%s11 + $0x34] sm:$0xf]
        %v979 = vld [vmem:[%s11 + $0x38] sm:$0xf]
        %v980 = vld [vmem:[%s11 + $0x3c] sm:$0xf]
        %v981 = vld [vmem:[%s12] sm:$0x1]
        %v983 = vperm.slane %v981, 0
        %v1001 = vunpack.c.l.b16 %v965
        %v1002 = vunpack.c.l.b16 %v966
        %v1003 = vunpack.c.l.b16 %v967
        %v1004 = vunpack.c.l.b16 %v968
        %v1005 = vunpack.c.l.b16 %v969
        %v1006 = vunpack.c.l.b16 %v970
        %v1007 = vunpack.c.l.b16 %v971
        %v1008 = vunpack.c.l.b16 %v972
        %v1009 = vunpack.c.l.b16 %v973
        %v1010 = vunpack.c.l.b16 %v974
        %v1011 = vunpack.c.l.b16 %v975
        %v1012 = vunpack.c.l.b16 %v976
        %v1013 = vunpack.c.l.b16 %v977
        %v1014 = vunpack.c.l.b16 %v978
        %v1015 = vunpack.c.l.b16 %v979
        %v1016 = vunpack.c.l.b16 %v980
        %v1017 = vpack.c.b16 %v1002, %v1001
        %v1018 = vpack.c.b16 %v1004, %v1003
        %v1019 = vpack.c.b16 %v1006, %v1005
        %v1020 = vpack.c.b16 %v1008, %v1007
        %v1021 = vpack.c.b16 %v1010, %v1009
        %v1022 = vpack.c.b16 %v1012, %v1011
        %v1023 = vpack.c.b16 %v1014, %v1013
        %v1024 = vpack.c.b16 %v1016, %v1015
        %1033 = vmatpush.bf16.msra.mxu0 %v1024
        %1034 = vmatpush.bf16.msra.mxu0 %v1023
        %1035 = vmatpush.bf16.msra.mxu0 %v1022
        %1036 = vmatpush.bf16.msra.mxu0 %v1021
        %1037 = vmatpush.bf16.msra.mxu0 %v1020
        %1038 = vmatpush.bf16.msra.mxu0 %v1019
        %1039 = vmatpush.bf16.msra.mxu0 %v1018
        %1040 = vmatpush.bf16.msra.mxu0 %v1017
        %1041 = vmatmul.bf16.gmra.mxu0 %v964
        %v1042 = vpop.f32.mrf.mxu0
        %v1043 = vadd.f32 %v983, %v1042
        %v1044 = vpop.f32.mrf.mxu0
        %1045 = vdwg.mxu0
        %v1046 = vadd.f32 %v850, %v1043
        %1047 = vst.msk [vmem:[%s431] sm:$0xff] %vm440, %v1046
        %s1048 = sand.u32 %s313, 1
        %s1049 = scalar_lea.sflag [#allocation3], %s1048
        %s1050 = sand.u32 %s313, 1
        %s1051 = smul.addr %s1050, 8
        %s1052 = scalar_lea.vmem [#allocation2], %s1051
        // Predicated region
        $region73: #{tpu_custom_call.1} parent=71 // pred_check
          %p1053 = pneg %p323
        $region74: #{tpu_custom_call.1} parent=71 // pred_check_branch
          %1055 = sbr.rel (%p1053) target = $region76
        $region75: #{tpu_custom_call.1} parent=71 // pred_region
          %1057 = vsyncadd %s1049, 0
          %s1058 = smul.addr %s27, 8
          %s1059 = scalar_lea.hbm %s13, %s1058
          %s1061 = sshll.u32 %s1052, 4
          %s1062 = int_to_ptr.vmem [resolvable:$true] %s1061
          %s1063 = sshll.u32 %s1059, 4
          %s1064 = int_to_ptr.hbm [resolvable:$true] %s1063
          %1066 = dma.vmem_to_hbm [thread:$0]  %s1062, 128, %s1064, %s1049
        $region76: #{tpu_custom_call.1} parent=71 // pred_fallthru
          _
      $region72: #{tpu_custom_call.1} parent=5 // pred_fallthru
        _
      %p1067 = scmp.le.s32.totalorder 2, %s22
      // Predicated region
      $region77: #{tpu_custom_call.1} parent=5 // pred_check
        %p1068 = pneg %p1067
      $region78: #{tpu_custom_call.1} parent=5 // pred_check_branch
        %1070 = sbr.rel (%p1068) target = $region80
      $region79: #{tpu_custom_call.1} parent=5 // pred_region
        %s1071 = ssub.s32 %s22, 2
        // Predicated region
        $region81: #{tpu_custom_call.1} parent=79 // pred_check
          %p1072 = pneg %p329
        $region82: #{tpu_custom_call.1} parent=79 // pred_check_branch
          %1074 = sbr.rel (%p1072) target = $region84
        $region83: #{tpu_custom_call.1} parent=79 // pred_region
          %s1075 = sand.u32 %s314, 1
          %s1076 = scalar_lea.sflag [#allocation3], %s1075
          %s1077 = sand.u32 %s314, 1
          %s1078 = smul.addr %s1077, 8
          %s1079 = scalar_lea.vmem [#allocation2], %s1078
          %1081 = dma.done %s1076, 128
        $region84: #{tpu_custom_call.1} parent=79 // pred_fallthru
          _
      $region80: #{tpu_custom_call.1} parent=5 // pred_fallthru
        _
    $region6: #{tpu_custom_call.1} parent=1 // loop_footer
      %s26 = sadd.s32 1, %s22
    $region7: #{tpu_custom_call.1} parent=1 // loop_footer_branch
      %21 = sbr.rel target = $region3
    $region8: #{tpu_custom_call.1} parent=1 // loop_exit
      _
    %1082 = vsyncpa [#allocation3], 1
    %s1083 = scalar_lea.sflag [#allocation3], 1
    %1084 = vsyncpa %s1083, 1

</llo_original>
